<compile_context>
chip_gen: v6e
topology: v6e:2x2x1
jax: 0.10.0
libtpu: 0.0.40
codegen_flags: <defaults>
</compile_context>

<pallas_src>
import math

import jax
import jax.numpy as jnp
from jax.experimental import pallas as pl
from jax.experimental.pallas import tpu as pltpu

NEG_SLOPE = 0.2


def _leaky_relu(x):
    # max(x, a*x) == LeakyReLU_a(x) for 0 < a < 1; single VALU op.
    return jnp.maximum(x, NEG_SLOPE * x)


# --------------------------------------------------------------------------
# Kernel
# --------------------------------------------------------------------------
def _fc_head_body(h_ref, w1t_ref, b1_ref, w2t_ref, b2_ref, w7_ref, b7_ref,
                  out_ref, y_ref=None, emb_ref=None):
    """One (tm, F) batch tile. y_ref/emb_ref are None on the unconditional path."""
    # In-kernel bf16 cast of the activations (no host pad/cast round trip);
    # MXU matmuls accumulate in f32; elementwise math stays f32 (v5e-friendly).
    h = h_ref[...].astype(jnp.bfloat16)                           # (tm, F)
    h1 = _leaky_relu(
        jnp.dot(h, w1t_ref[...], preferred_element_type=jnp.float32)
        + b1_ref[...])                                            # (tm, F) f32
    h2 = _leaky_relu(
        jnp.dot(h1.astype(jnp.bfloat16), w2t_ref[...],
                preferred_element_type=jnp.float32)
        + b2_ref[...])                                            # (tm, F) f32

    # l7(h2) + <emb(y), h2> folded into one VPU multiply + cross-lane reduce:
    #   out = sum(h2 * (w7 + emb[y]), axis=1) + b7       (distributive, exact)
    proj_w = w7_ref[...]                                          # (1, F) f32
    if y_ref is not None:
        # In-kernel class-embedding gather: emb is a tiny VMEM-resident (C, F)
        # table; pick the row via a static C-way select chain. VPU ops are free
        # filler here (kernel is HBM-bound at F=128); avoids streaming a (B, F)
        # f32 gather through HBM.
        yv = y_ref[...]                                           # (tm, 1) i32
        emb = emb_ref[...]                                        # (C, F) f32
        for c in range(emb_ref.shape[0]):                         # static unroll
            sel = (yv == c).astype(jnp.float32)                   # (tm, 1)
            proj_w = proj_w + sel * emb[c:c + 1, :]               # (tm, F)
    out = jnp.sum(h2 * proj_w, axis=1, keepdims=True) + b7_ref[0, 0]
    out_ref[...] = out.astype(out_ref.dtype)                      # (tm, 1)


def snpdfc3_kernel_cond(h_ref, y_ref, w1t_ref, b1_ref, w2t_ref, b2_ref,
                        w7_ref, emb_ref, b7_ref, out_ref):
    _fc_head_body(h_ref, w1t_ref, b1_ref, w2t_ref, b2_ref, w7_ref, b7_ref,
                  out_ref, y_ref=y_ref, emb_ref=emb_ref)


def snpdfc3_kernel_uncond(h_ref, w1t_ref, b1_ref, w2t_ref, b2_ref,
                          w7_ref, b7_ref, out_ref):
    _fc_head_body(h_ref, w1t_ref, b1_ref, w2t_ref, b2_ref, w7_ref, b7_ref,
                  out_ref)


# --------------------------------------------------------------------------
# Wrapper
# --------------------------------------------------------------------------
def _round_up(x, m):
    return (x + m - 1) // m * m


def _choose_tile(B, block_b):
    """Batch tile: large (default 512) to amortize ~0.35us/step grid overhead
    and fill the 256-wide MXU on v6e/v7x; keep >=2 grid steps for big batches
    so v7x's two TensorCores both get work (v5e/v6e are single-TC)."""
    block_b = max(8, _round_up(block_b, 8))
    tm = min(block_b, _round_up(B, 8))
    if pl.cdiv(B, tm) == 1 and B >= 512:
        tm = _round_up(pl.cdiv(B, 2), 8)   # split so the "parallel" axis has 2 steps
    return tm


def prepare_snpdfc3_params(params):
    """One-time kernel-ready parameter prep (hoisted out of the per-call path)."""
    F = params["w1"].shape[0]
    prepped = {
        "w1t": params["w1"].T.astype(jnp.bfloat16),            # (F, F)
        "w2t": params["w2"].T.astype(jnp.bfloat16),            # (F, F)
        "b1": params["b1"].reshape(1, F).astype(jnp.float32),
        "b2": params["b2"].reshape(1, F).astype(jnp.float32),
        "w7": params["w7"].reshape(1, F).astype(jnp.float32),
        "b7": params["b7"].reshape(1, 1).astype(jnp.float32),
    }
    if "emb" in params:
        prepped["emb"] = params["emb"].astype(jnp.float32)     # (C, F) tiny table
    return prepped


def snpdfc3_forward(h, prepped, y=None, block_b=512):
    """h: (B, F) float features (decoder_only path). prepped: output of
    prepare_snpdfc3_params. y: optional (B,) int32 class labels."""
    B, F = h.shape
    tm = _choose_tile(B, block_b)
    # Ragged last tile is fine: rows are independent and out-of-bounds output
    # writes of the last block are dropped by Pallas.
    grid = (pl.cdiv(B, tm),)

    act_spec = pl.BlockSpec((tm, F), lambda i: (i, 0))

    def resident_spec(shape):
        # Constant index_map -> block stays VMEM-resident across all grid steps.
        # TODO(synk): on v7x (64 MiB VMEM) with large F, single-buffer these via
        # pipeline_mode=pl.Buffered(1); irrelevant at F=128.
        return pl.BlockSpec(shape, lambda i: (0, 0))

    in_specs = [act_spec]
    args = [h]
    if y is not None:
        if "emb" not in prepped:
            raise ValueError("conditional forward requires 'emb' in params")
        in_specs.append(pl.BlockSpec((tm, 1), lambda i: (i, 0)))   # labels tile
        args.append(y.reshape(B, 1).astype(jnp.int32))
    in_specs += [
        resident_spec((F, F)),                                     # w1t
        resident_spec((1, F)),                                     # b1
        resident_spec((F, F)),                                     # w2t
        resident_spec((1, F)),                                     # b2
        resident_spec((1, F)),                                     # w7
    ]
    args += [prepped["w1t"], prepped["b1"], prepped["w2t"], prepped["b2"],
             prepped["w7"]]
    if y is not None:
        C = prepped["emb"].shape[0]
        in_specs.append(resident_spec((C, F)))                     # emb table
        args.append(prepped["emb"])
    in_specs.append(pl.BlockSpec(memory_space=pltpu.MemorySpace.SMEM))  # b7
    args.append(prepped["b7"])

    kernel = snpdfc3_kernel_cond if y is not None else snpdfc3_kernel_uncond

    return pl.pallas_call(
        kernel,
        out_shape=jax.ShapeDtypeStruct((B, 1), jnp.float32),
        grid=grid,
        in_specs=in_specs,
        out_specs=pl.BlockSpec((tm, 1), lambda i: (i, 0)),
        compiler_params=pltpu.CompilerParams(
            dimension_semantics=("parallel",)),   # v7x: shard batch over 2 TCs
    )(*args)


# --------------------------------------------------------------------------
# Parameter init glue (plain JAX)
# --------------------------------------------------------------------------
def _spectral_normalize(w, key, n_power_iterations=3, eps=1e-12):
    """Mimic torch.nn.utils.spectral_norm: W / sigma_max(W) via power iteration."""
    u = jax.random.normal(key, (w.shape[0],), dtype=w.dtype)
    u = u / (jnp.linalg.norm(u) + eps)
    v = None
    for _ in range(n_power_iterations):
        v = w.T @ u
        v = v / (jnp.linalg.norm(v) + eps)
        u = w @ v
        u = u / (jnp.linalg.norm(u) + eps)
    sigma = u @ (w @ v)
    return w / sigma


def _xavier_uniform(key, shape):
    fan_out, fan_in = shape
    a = math.sqrt(6.0 / (fan_in + fan_out))
    return jax.random.uniform(key, shape, jnp.float32, -a, a)


def _torch_linear_weight(key, shape):
    # torch.nn.Linear default: kaiming_uniform_(a=sqrt(5)) -> U(-1/sqrt(fan_in), .)
    fan_in = shape[1]
    bound = 1.0 / math.sqrt(fan_in)
    return jax.random.uniform(key, shape, jnp.float32, -bound, bound)


def _torch_linear_bias(key, fan_in, n):
    bound = 1.0 / math.sqrt(fan_in)
    return jax.random.uniform(key, (n,), jnp.float32, -bound, bound)


def init_snpdfc3_params(key, num_features=128, num_classes=4):
    ks = jax.random.split(key, 10)
    w1 = _torch_linear_weight(ks[0], (num_features, num_features))
    b1 = _torch_linear_bias(ks[1], num_features, num_features)
    w2 = _torch_linear_weight(ks[2], (num_features, num_features))
    b2 = _torch_linear_bias(ks[3], num_features, num_features)
    w7 = _xavier_uniform(ks[4], (1, num_features))             # l7: xavier init
    b7 = _torch_linear_bias(ks[5], num_features, 1)
    emb = _xavier_uniform(ks[6], (num_classes, num_features))  # l_y: xavier init
    w1 = _spectral_normalize(w1, ks[7])
    w2 = _spectral_normalize(w2, ks[8])
    w7 = _spectral_normalize(w7, ks[9])
    emb = _spectral_normalize(emb, jax.random.fold_in(key, 123))
    return dict(w1=w1, b1=b1, w2=w2, b2=b2, w7=w7, b7=b7, emb=emb)


# --------------------------------------------------------------------------
# Pure-JAX references
# --------------------------------------------------------------------------
def _reference_forward(h, params, y=None, bf16_matmul=True):
    """Reference. bf16_matmul=True mirrors the kernel's operand precision."""
    cast = (lambda a: a.astype(jnp.bfloat16)) if bf16_matmul else (
        lambda a: a.astype(jnp.float32))
    h1 = _leaky_relu(
        jnp.dot(cast(h), cast(params["w1"].T),
                preferred_element_type=jnp.float32) + params["b1"])
    h2 = _leaky_relu(
        jnp.dot(cast(h1), cast(params["w2"].T),
                preferred_element_type=jnp.float32) + params["b2"])
    out = h2 @ params["w7"].T.astype(jnp.float32) + params["b7"]
    if y is not None:
        out = out + jnp.sum(params["emb"][y] * h2, axis=1, keepdims=True)
    return out


if __name__ == "__main__":
    B, F, C = 256, 128, 4  # batch, num_features, num_classes (small synthetic)
    key = jax.random.PRNGKey(0)
    k_h, k_y, k_p = jax.random.split(key, 3)

    h = jax.random.normal(k_h, (B, F), dtype=jnp.float32)
    y = jax.random.randint(k_y, (B,), 0, C, dtype=jnp.int32)
    params = init_snpdfc3_params(k_p, num_features=F, num_classes=C)
    prepped = prepare_snpdfc3_params(params)   # one-time kernel-ready params

    out_cond = jax.block_until_ready(snpdfc3_forward(h, prepped, y))
    out_uncond = jax.block_until_ready(snpdfc3_forward(h, prepped, None))
    assert out_cond.shape == (B, 1) and out_uncond.shape == (B, 1)

    # Matched-precision (bf16 matmul operand) reference: kernel numerics.
    ref_c = _reference_forward(h, params, y, bf16_matmul=True)
    ref_u = _reference_forward(h, params, None, bf16_matmul=True)
    assert jnp.allclose(out_cond, ref_c, atol=2e-3, rtol=2e-3), "cond mismatch"
    assert jnp.allclose(out_uncond, ref_u, atol=2e-3, rtol=2e-3), "uncond mismatch"

    # Full-f32 reference: module semantics (loose tol for bf16 matmuls).
    ref_f32 = _reference_forward(h, params, y, bf16_matmul=False)
    assert jnp.allclose(out_cond, ref_f32, atol=5e-2, rtol=5e-2), "f32 mismatch"

    # Ragged-grid check: B not a multiple of the tile (last block padded; rows
    # are independent and OOB output writes are dropped).
    Br = 200
    out_r = jax.block_until_ready(
        snpdfc3_forward(h[:Br], prepped, y[:Br], block_b=128))
    ref_r = _reference_forward(h[:Br], params, y[:Br], bf16_matmul=True)
    assert out_r.shape == (Br, 1)
    assert jnp.allclose(out_r, ref_r, atol=2e-3, rtol=2e-3), "ragged mismatch"

    print("KERNEL_OK")
</pallas_src>

<mosaic_0001>
module attributes {stable_mosaic.version = 11 : i64} {
  func.func @snpdfc3_kernel_cond(%arg0: i32, %arg1: memref<256x128xf32, #tpu.memory_space<vmem>>, %arg2: memref<256x1xi32, #tpu.memory_space<vmem>>, %arg3: memref<128x128xbf16, #tpu.memory_space<vmem>>, %arg4: memref<1x128xf32, #tpu.memory_space<vmem>>, %arg5: memref<128x128xbf16, #tpu.memory_space<vmem>>, %arg6: memref<1x128xf32, #tpu.memory_space<vmem>>, %arg7: memref<1x128xf32, #tpu.memory_space<vmem>>, %arg8: memref<4x128xf32, #tpu.memory_space<vmem>>, %arg9: memref<1x1xf32, #tpu.memory_space<smem>>, %arg10: memref<256x1xf32, #tpu.memory_space<vmem>>) attributes {dimension_semantics = [#tpu.dimension_semantics<parallel>], iteration_bounds = array<i64: 1>, scalar_prefetch = 0 : i64, scratch_operands = 0 : i64, tpu.core_type = #tpu.core_type<tc>, window_params = [{transform_indices = @transform_0, window_bounds = array<i64: 256, 128>}, {transform_indices = @transform_1, window_bounds = array<i64: 256, 1>}, {pipeline_mode = #tpu.pipeline_mode<synchronous>, transform_indices = @transform_2, window_bounds = array<i64: 128, 128>}, {pipeline_mode = #tpu.pipeline_mode<synchronous>, transform_indices = @transform_3, window_bounds = array<i64: 1, 128>}, {pipeline_mode = #tpu.pipeline_mode<synchronous>, transform_indices = @transform_4, window_bounds = array<i64: 128, 128>}, {pipeline_mode = #tpu.pipeline_mode<synchronous>, transform_indices = @transform_5, window_bounds = array<i64: 1, 128>}, {pipeline_mode = #tpu.pipeline_mode<synchronous>, transform_indices = @transform_6, window_bounds = array<i64: 1, 128>}, {pipeline_mode = #tpu.pipeline_mode<synchronous>, transform_indices = @transform_7, window_bounds = array<i64: 4, 128>}, {transform_indices = @transform_8, window_bounds = array<i64: 1, 1>}, {transform_indices = @transform_9, window_bounds = array<i64: 256, 1>}]} {
    %c0 = arith.constant 0 : index
    %c0_0 = arith.constant 0 : index
    %0 = vector.load %arg1[%c0, %c0_0] : memref<256x128xf32, #tpu.memory_space<vmem>>, vector<256x128xf32>
    %1 = arith.truncf %0 : vector<256x128xf32> to vector<256x128xbf16>
    %c0_1 = arith.constant 0 : index
    %c0_2 = arith.constant 0 : index
    %2 = vector.load %arg3[%c0_1, %c0_2] : memref<128x128xbf16, #tpu.memory_space<vmem>>, vector<128x128xbf16>
    %cst = arith.constant dense<0.000000e+00> : vector<256x128xf32>
    %3 = tpu.matmul %1, %2, %cst {dimension_numbers = #tpu.dot_dimension_numbers<[1], [0], [0], [1], [0, 0, 1, 1], [], []>} : vector<256x128xbf16>, vector<128x128xbf16>, vector<256x128xf32> -> vector<256x128xf32>
    %c0_3 = arith.constant 0 : index
    %c0_4 = arith.constant 0 : index
    %4 = vector.load %arg4[%c0_3, %c0_4] : memref<1x128xf32, #tpu.memory_space<vmem>>, vector<1x128xf32>
    %5 = vector.broadcast %4 : vector<1x128xf32> to vector<256x128xf32>
    %6 = arith.addf %3, %5 : vector<256x128xf32>
    %cst_5 = arith.constant 2.000000e-01 : f32
    %7 = vector.broadcast %cst_5 : f32 to vector<256x128xf32>
    %8 = arith.mulf %7, %6 : vector<256x128xf32>
    %9 = arith.maximumf %6, %8 : vector<256x128xf32>
    %10 = arith.truncf %9 : vector<256x128xf32> to vector<256x128xbf16>
    %c0_6 = arith.constant 0 : index
    %c0_7 = arith.constant 0 : index
    %11 = vector.load %arg5[%c0_6, %c0_7] : memref<128x128xbf16, #tpu.memory_space<vmem>>, vector<128x128xbf16>
    %cst_8 = arith.constant dense<0.000000e+00> : vector<256x128xf32>
    %12 = tpu.matmul %10, %11, %cst_8 {dimension_numbers = #tpu.dot_dimension_numbers<[1], [0], [0], [1], [0, 0, 1, 1], [], []>} : vector<256x128xbf16>, vector<128x128xbf16>, vector<256x128xf32> -> vector<256x128xf32>
    %c0_9 = arith.constant 0 : index
    %c0_10 = arith.constant 0 : index
    %13 = vector.load %arg6[%c0_9, %c0_10] : memref<1x128xf32, #tpu.memory_space<vmem>>, vector<1x128xf32>
    %14 = vector.broadcast %13 : vector<1x128xf32> to vector<256x128xf32>
    %15 = arith.addf %12, %14 : vector<256x128xf32>
    %cst_11 = arith.constant 2.000000e-01 : f32
    %16 = vector.broadcast %cst_11 : f32 to vector<256x128xf32>
    %17 = arith.mulf %16, %15 : vector<256x128xf32>
    %18 = arith.maximumf %15, %17 : vector<256x128xf32>
    %c0_12 = arith.constant 0 : index
    %c0_13 = arith.constant 0 : index
    %19 = vector.load %arg7[%c0_12, %c0_13] : memref<1x128xf32, #tpu.memory_space<vmem>>, vector<1x128xf32>
    %c0_14 = arith.constant 0 : index
    %c0_15 = arith.constant 0 : index
    %20 = vector.load %arg2[%c0_14, %c0_15] : memref<256x1xi32, #tpu.memory_space<vmem>>, vector<256x1xi32>
    %c0_16 = arith.constant 0 : index
    %c0_17 = arith.constant 0 : index
    %21 = vector.load %arg8[%c0_16, %c0_17] : memref<4x128xf32, #tpu.memory_space<vmem>>, vector<4x128xf32>
    %c0_i32 = arith.constant 0 : i32
    %22 = vector.broadcast %c0_i32 : i32 to vector<256x1xi32>
    %23 = arith.cmpi eq, %20, %22 : vector<256x1xi32>
    %24 = arith.extui %23 : vector<256x1xi1> to vector<256x1xi32>
    %25 = arith.sitofp %24 : vector<256x1xi32> to vector<256x1xf32>
    %26 = vector.extract_strided_slice %21 {offsets = [0, 0], sizes = [1, 128], strides = [1, 1]} : vector<4x128xf32> to vector<1x128xf32>
    %27 = vector.broadcast %25 : vector<256x1xf32> to vector<256x128xf32>
    %28 = vector.broadcast %26 : vector<1x128xf32> to vector<256x128xf32>
    %29 = arith.mulf %27, %28 : vector<256x128xf32>
    %30 = vector.broadcast %19 : vector<1x128xf32> to vector<256x128xf32>
    %31 = arith.addf %30, %29 : vector<256x128xf32>
    %c1_i32 = arith.constant 1 : i32
    %32 = vector.broadcast %c1_i32 : i32 to vector<256x1xi32>
    %33 = arith.cmpi eq, %20, %32 : vector<256x1xi32>
    %34 = arith.extui %33 : vector<256x1xi1> to vector<256x1xi32>
    %35 = arith.sitofp %34 : vector<256x1xi32> to vector<256x1xf32>
    %36 = vector.extract_strided_slice %21 {offsets = [1, 0], sizes = [1, 128], strides = [1, 1]} : vector<4x128xf32> to vector<1x128xf32>
    %37 = vector.broadcast %35 : vector<256x1xf32> to vector<256x128xf32>
    %38 = vector.broadcast %36 : vector<1x128xf32> to vector<256x128xf32>
    %39 = arith.mulf %37, %38 : vector<256x128xf32>
    %40 = arith.addf %31, %39 : vector<256x128xf32>
    %c2_i32 = arith.constant 2 : i32
    %41 = vector.broadcast %c2_i32 : i32 to vector<256x1xi32>
    %42 = arith.cmpi eq, %20, %41 : vector<256x1xi32>
    %43 = arith.extui %42 : vector<256x1xi1> to vector<256x1xi32>
    %44 = arith.sitofp %43 : vector<256x1xi32> to vector<256x1xf32>
    %45 = vector.extract_strided_slice %21 {offsets = [2, 0], sizes = [1, 128], strides = [1, 1]} : vector<4x128xf32> to vector<1x128xf32>
    %46 = vector.broadcast %44 : vector<256x1xf32> to vector<256x128xf32>
    %47 = vector.broadcast %45 : vector<1x128xf32> to vector<256x128xf32>
    %48 = arith.mulf %46, %47 : vector<256x128xf32>
    %49 = arith.addf %40, %48 : vector<256x128xf32>
    %c3_i32 = arith.constant 3 : i32
    %50 = vector.broadcast %c3_i32 : i32 to vector<256x1xi32>
    %51 = arith.cmpi eq, %20, %50 : vector<256x1xi32>
    %52 = arith.extui %51 : vector<256x1xi1> to vector<256x1xi32>
    %53 = arith.sitofp %52 : vector<256x1xi32> to vector<256x1xf32>
    %54 = vector.extract_strided_slice %21 {offsets = [3, 0], sizes = [1, 128], strides = [1, 1]} : vector<4x128xf32> to vector<1x128xf32>
    %55 = vector.broadcast %53 : vector<256x1xf32> to vector<256x128xf32>
    %56 = vector.broadcast %54 : vector<1x128xf32> to vector<256x128xf32>
    %57 = arith.mulf %55, %56 : vector<256x128xf32>
    %58 = arith.addf %49, %57 : vector<256x128xf32>
    %59 = arith.mulf %18, %58 : vector<256x128xf32>
    %cst_18 = arith.constant dense<0.000000e+00> : vector<256xf32>
    %60 = vector.multi_reduction <add>, %59, %cst_18 [1] : vector<256x128xf32> to vector<256xf32>
    %61 = vector.shape_cast %60 : vector<256xf32> to vector<256x1xf32>
    %c0_19 = arith.constant 0 : index
    %c0_20 = arith.constant 0 : index
    %62 = memref.load %arg9[%c0_19, %c0_20] : memref<1x1xf32, #tpu.memory_space<smem>>
    %63 = vector.broadcast %62 : f32 to vector<256x1xf32>
    %64 = arith.addf %61, %63 : vector<256x1xf32>
    %c0_21 = arith.constant 0 : index
    %c0_22 = arith.constant 0 : index
    %65 = vector.load %arg10[%c0_21, %c0_22] : memref<256x1xf32, #tpu.memory_space<vmem>>, vector<256x1xf32>
    tpu.vector_store %arg10[%c0_21, %c0_22], %64 {strides = array<i32>} : memref<256x1xf32, #tpu.memory_space<vmem>>, vector<256x1xf32>,
    return
  }
  func.func @transform_0(%arg0: i32) -> (i32, i32) {
    %c0_i32 = arith.constant 0 : i32
    %c0_i32_0 = arith.constant 0 : i32
    return %arg0, %c0_i32 : i32, i32
  }
  func.func @transform_1(%arg0: i32) -> (i32, i32) {
    %c0_i32 = arith.constant 0 : i32
    %c0_i32_0 = arith.constant 0 : i32
    return %arg0, %c0_i32 : i32, i32
  }
  func.func @transform_2(%arg0: i32) -> (i32, i32) {
    %c0_i32 = arith.constant 0 : i32
    %c0_i32_0 = arith.constant 0 : i32
    %c0_i32_1 = arith.constant 0 : i32
    return %c0_i32, %c0_i32_0 : i32, i32
  }
  func.func @transform_3(%arg0: i32) -> (i32, i32) {
    %c0_i32 = arith.constant 0 : i32
    %c0_i32_0 = arith.constant 0 : i32
    %c0_i32_1 = arith.constant 0 : i32
    return %c0_i32, %c0_i32_0 : i32, i32
  }
  func.func @transform_4(%arg0: i32) -> (i32, i32) {
    %c0_i32 = arith.constant 0 : i32
    %c0_i32_0 = arith.constant 0 : i32
    %c0_i32_1 = arith.constant 0 : i32
    return %c0_i32, %c0_i32_0 : i32, i32
  }
  func.func @transform_5(%arg0: i32) -> (i32, i32) {
    %c0_i32 = arith.constant 0 : i32
    %c0_i32_0 = arith.constant 0 : i32
    %c0_i32_1 = arith.constant 0 : i32
    return %c0_i32, %c0_i32_0 : i32, i32
  }
  func.func @transform_6(%arg0: i32) -> (i32, i32) {
    %c0_i32 = arith.constant 0 : i32
    %c0_i32_0 = arith.constant 0 : i32
    %c0_i32_1 = arith.constant 0 : i32
    return %c0_i32, %c0_i32_0 : i32, i32
  }
  func.func @transform_7(%arg0: i32) -> (i32, i32) {
    %c0_i32 = arith.constant 0 : i32
    %c0_i32_0 = arith.constant 0 : i32
    %c0_i32_1 = arith.constant 0 : i32
    return %c0_i32, %c0_i32_0 : i32, i32
  }
  func.func @transform_8(%arg0: i32) -> (i32, i32) {
    %c0_i32 = arith.constant 0 : i32
    %c0_i32_0 = arith.constant 0 : i32
    %c0_i32_1 = arith.constant 0 : i32
    return %c0_i32, %c0_i32_0 : i32, i32
  }
  func.func @transform_9(%arg0: i32) -> (i32, i32) {
    %c0_i32 = arith.constant 0 : i32
    %c0_i32_0 = arith.constant 0 : i32
    return %arg0, %c0_i32 : i32, i32
  }
}

</mosaic_0001>

<llo_original>
// kernel: tpu_custom_call.1
$region0: #{tpu_custom_call.1}
  #allocation0 [shape = 'u32[]', space=smem, size = 0x4, offset = 0x4, fixed_abs, tag = 'smem constant byte address 0x4 - core index']
  #allocation1 [shape = 'u32[144,128]{1,0:T(1,128)}', space=vmem, size = 0x12000, scoped, tag = 'internal scratch']
  #allocation2 [shape = 'f32[1,1]{1,0:T(1,128)S(6)}', space=smem, size = 0x200, scoped, tag = 'scoped memory for tpu_custom_call.1']
  %s0 = inlined_call_operand.vmem [shape: f32[256,128], index: 0, kind: input, shape index: {}]
  %s1 = inlined_call_operand.vmem [shape: s32[256,1], index: 1, kind: input, shape index: {}]
  %s2 = inlined_call_operand.hbm [shape: bf16[128,128], index: 2, kind: input, shape index: {}]
  %s3 = inlined_call_operand.vmem [shape: f32[1,128], index: 3, kind: input, shape index: {}]
  %s4 = inlined_call_operand.hbm [shape: bf16[128,128], index: 4, kind: input, shape index: {}]
  %s5 = inlined_call_operand.vmem [shape: f32[1,128], index: 5, kind: input, shape index: {}]
  %s6 = inlined_call_operand.vmem [shape: f32[1,128], index: 6, kind: input, shape index: {}]
  %s7 = inlined_call_operand.vmem [shape: f32[4,128], index: 7, kind: input, shape index: {}]
  %s8 = inlined_call_operand.<no memory space> [shape: f32[1,1], index: 8, kind: input, shape index: {}]
  %s9 = inlined_call_operand.vmem [shape: f32[256,1], index: 9, kind: output, shape index: {}]
  %s10 = sld [smem:[#allocation0]]
  $region54: #{tpu_custom_call.1} parent=0
    _
  %s12 = ssub.s32 1, %s10
  %s13 = scalar_select 0, %s12, %s10
  %14 = sst [smem:[#allocation2]] %s8
  $region1: #{tpu_custom_call.1} parent=0
    #allocation3 [shape = 'u8[32768]{0}', space=vmem, size = 0x8000, scoped, tag = 'input window, operand 2, single buffered']
    #allocation4 [shape = 's32[1]{0}', space=sflag, size = 0x4, scoped, tag = 'scoped memory for tpu_custom_call.1']
    #allocation5 [shape = 'u8[32768]{0}', space=vmem, size = 0x8000, scoped, tag = 'input window, operand 4, single buffered']
    #allocation6 [shape = 's32[1]{0}', space=sflag, size = 0x4, scoped, tag = 'scoped memory for tpu_custom_call.1']
    %15 = vsyncpa [#allocation4], 0
    %16 = vsyncpa [#allocation6], 0
    // Predicated region
    $region2: #{tpu_custom_call.1} parent=1 // pred_check
      _
    $region3: #{tpu_custom_call.1} parent=1 // pred_check_branch
      %18 = sbr.rel (0) target = $region5
    $region4: #{tpu_custom_call.1} parent=1 // pred_region
      _
    $region5: #{tpu_custom_call.1} parent=1 // pred_fallthru
      _
    // Predicated region
    $region6: #{tpu_custom_call.1} parent=1 // pred_check
      _
    $region7: #{tpu_custom_call.1} parent=1 // pred_check_branch
      %20 = sbr.rel (0) target = $region9
    $region8: #{tpu_custom_call.1} parent=1 // pred_region
      _
    $region9: #{tpu_custom_call.1} parent=1 // pred_fallthru
      _
    // Predicated region
    $region10: #{tpu_custom_call.1} parent=1 // pred_check
      _
    $region11: #{tpu_custom_call.1} parent=1 // pred_check_branch
      %22 = sbr.rel (0) target = $region13
    $region12: #{tpu_custom_call.1} parent=1 // pred_region
      %s24 = ssub.s32 1024, 1024
      %25 = vsyncadd [#allocation4], %s24
      %s26 = sshll.u32 [#allocation3], 4
      %s27 = int_to_ptr.vmem [resolvable:$true] %s26
      %32 = dma.hbm_to_vmem [thread:$0]  %s2, 1024, %s27, [#allocation4], 64, 64, 4
    $region13: #{tpu_custom_call.1} parent=1 // pred_fallthru
      _
    // Predicated region
    $region14: #{tpu_custom_call.1} parent=1 // pred_check
      _
    $region15: #{tpu_custom_call.1} parent=1 // pred_check_branch
      %34 = sbr.rel (0) target = $region17
    $region16: #{tpu_custom_call.1} parent=1 // pred_region
      _
    $region17: #{tpu_custom_call.1} parent=1 // pred_fallthru
      _
    // Predicated region
    $region18: #{tpu_custom_call.1} parent=1 // pred_check
      _
    $region19: #{tpu_custom_call.1} parent=1 // pred_check_branch
      %36 = sbr.rel (0) target = $region21
    $region20: #{tpu_custom_call.1} parent=1 // pred_region
      %s38 = ssub.s32 1024, 1024
      %39 = vsyncadd [#allocation6], %s38
      %s40 = sshll.u32 [#allocation5], 4
      %s41 = int_to_ptr.vmem [resolvable:$true] %s40
      %46 = dma.hbm_to_vmem [thread:$0]  %s4, 1024, %s41, [#allocation6], 64, 64, 4
    $region21: #{tpu_custom_call.1} parent=1 // pred_fallthru
      _
    // Predicated region
    $region22: #{tpu_custom_call.1} parent=1 // pred_check
      _
    $region23: #{tpu_custom_call.1} parent=1 // pred_check_branch
      %48 = sbr.rel (0) target = $region25
    $region24: #{tpu_custom_call.1} parent=1 // pred_region
      _
    $region25: #{tpu_custom_call.1} parent=1 // pred_fallthru
      _
    // Predicated region
    $region26: #{tpu_custom_call.1} parent=1 // pred_check
      _
    $region27: #{tpu_custom_call.1} parent=1 // pred_check_branch
      %50 = sbr.rel (0) target = $region29
    $region28: #{tpu_custom_call.1} parent=1 // pred_region
      _
    $region29: #{tpu_custom_call.1} parent=1 // pred_fallthru
      _
    // Predicated region
    $region30: #{tpu_custom_call.1} parent=1 // pred_check
      _
    $region31: #{tpu_custom_call.1} parent=1 // pred_check_branch
      %52 = sbr.rel (0) target = $region33
    $region32: #{tpu_custom_call.1} parent=1 // pred_region
      _
    $region33: #{tpu_custom_call.1} parent=1 // pred_fallthru
      _
    // Predicated region
    $region34: #{tpu_custom_call.1} parent=1 // pred_check
      _
    $region35: #{tpu_custom_call.1} parent=1 // pred_check_branch
      %54 = sbr.rel (0) target = $region37
    $region36: #{tpu_custom_call.1} parent=1 // pred_region
      _
    $region37: #{tpu_custom_call.1} parent=1 // pred_fallthru
      _
    // Predicated region
    $region38: #{tpu_custom_call.1} parent=1 // pred_check
      _
    $region39: #{tpu_custom_call.1} parent=1 // pred_check_branch
      %56 = sbr.rel (0) target = $region41
    $region40: #{tpu_custom_call.1} parent=1 // pred_region
      %57 = dma.done [#allocation4], 1024
    $region41: #{tpu_custom_call.1} parent=1 // pred_fallthru
      _
    // Predicated region
    $region42: #{tpu_custom_call.1} parent=1 // pred_check
      _
    $region43: #{tpu_custom_call.1} parent=1 // pred_check_branch
      %59 = sbr.rel (0) target = $region45
    $region44: #{tpu_custom_call.1} parent=1 // pred_region
      %60 = dma.done [#allocation6], 1024
    $region45: #{tpu_custom_call.1} parent=1 // pred_fallthru
      _
    %v62 = vld [vmem:[%s0] sm:$0xff]
    %v63 = vld [vmem:[%s0 + $0x8] sm:$0xff]
    %v64 = vld [vmem:[%s0 + $0x10] sm:$0xff]
    %v65 = vld [vmem:[%s0 + $0x18] sm:$0xff]
    %v66 = vld [vmem:[%s0 + $0x20] sm:$0xff]
    %v67 = vld [vmem:[%s0 + $0x28] sm:$0xff]
    %v68 = vld [vmem:[%s0 + $0x30] sm:$0xff]
    %v69 = vld [vmem:[%s0 + $0x38] sm:$0xff]
    %v70 = vld [vmem:[%s0 + $0x40] sm:$0xff]
    %v71 = vld [vmem:[%s0 + $0x48] sm:$0xff]
    %v72 = vld [vmem:[%s0 + $0x50] sm:$0xff]
    %v73 = vld [vmem:[%s0 + $0x58] sm:$0xff]
    %v74 = vld [vmem:[%s0 + $0x60] sm:$0xff]
    %v75 = vld [vmem:[%s0 + $0x68] sm:$0xff]
    %v76 = vld [vmem:[%s0 + $0x70] sm:$0xff]
    %v77 = vld [vmem:[%s0 + $0x78] sm:$0xff]
    %v78 = vld [vmem:[%s0 + $0x80] sm:$0xff]
    %v79 = vld [vmem:[%s0 + $0x88] sm:$0xff]
    %v80 = vld [vmem:[%s0 + $0x90] sm:$0xff]
    %v81 = vld [vmem:[%s0 + $0x98] sm:$0xff]
    %v82 = vld [vmem:[%s0 + $0xa0] sm:$0xff]
    %v83 = vld [vmem:[%s0 + $0xa8] sm:$0xff]
    %v84 = vld [vmem:[%s0 + $0xb0] sm:$0xff]
    %v85 = vld [vmem:[%s0 + $0xb8] sm:$0xff]
    %v86 = vld [vmem:[%s0 + $0xc0] sm:$0xff]
    %v87 = vld [vmem:[%s0 + $0xc8] sm:$0xff]
    %v88 = vld [vmem:[%s0 + $0xd0] sm:$0xff]
    %v89 = vld [vmem:[%s0 + $0xd8] sm:$0xff]
    %v90 = vld [vmem:[%s0 + $0xe0] sm:$0xff]
    %v91 = vld [vmem:[%s0 + $0xe8] sm:$0xff]
    %v92 = vld [vmem:[%s0 + $0xf0] sm:$0xff]
    %v93 = vld [vmem:[%s0 + $0xf8] sm:$0xff]
    %v94 = vpack.c.bf16 %v63, %v62
    %v95 = vpack.c.bf16 %v65, %v64
    %v96 = vpack.c.bf16 %v67, %v66
    %v97 = vpack.c.bf16 %v69, %v68
    %v98 = vpack.c.bf16 %v71, %v70
    %v99 = vpack.c.bf16 %v73, %v72
    %v100 = vpack.c.bf16 %v75, %v74
    %v101 = vpack.c.bf16 %v77, %v76
    %v102 = vpack.c.bf16 %v79, %v78
    %v103 = vpack.c.bf16 %v81, %v80
    %v104 = vpack.c.bf16 %v83, %v82
    %v105 = vpack.c.bf16 %v85, %v84
    %v106 = vpack.c.bf16 %v87, %v86
    %v107 = vpack.c.bf16 %v89, %v88
    %v108 = vpack.c.bf16 %v91, %v90
    %v109 = vpack.c.bf16 %v93, %v92
    %v110 = vld [vmem:[#allocation3] sm:$0xf]
    %v111 = vld [vmem:[#allocation3 + $0x4] sm:$0xf]
    %v112 = vld [vmem:[#allocation3 + $0x8] sm:$0xf]
    %v113 = vld [vmem:[#allocation3 + $0xc] sm:$0xf]
    %v114 = vld [vmem:[#allocation3 + $0x10] sm:$0xf]
    %v115 = vld [vmem:[#allocation3 + $0x14] sm:$0xf]
    %v116 = vld [vmem:[#allocation3 + $0x18] sm:$0xf]
    %v117 = vld [vmem:[#allocation3 + $0x1c] sm:$0xf]
    %v118 = vld [vmem:[#allocation3 + $0x20] sm:$0xf]
    %v119 = vld [vmem:[#allocation3 + $0x24] sm:$0xf]
    %v120 = vld [vmem:[#allocation3 + $0x28] sm:$0xf]
    %v121 = vld [vmem:[#allocation3 + $0x2c] sm:$0xf]
    %v122 = vld [vmem:[#allocation3 + $0x30] sm:$0xf]
    %v123 = vld [vmem:[#allocation3 + $0x34] sm:$0xf]
    %v124 = vld [vmem:[#allocation3 + $0x38] sm:$0xf]
    %v125 = vld [vmem:[#allocation3 + $0x3c] sm:$0xf]
    %v126 = vld [vmem:[%s3] sm:$0x1]
    %v128 = vlaneseq
    %v129 = vshrl.u32 %v128, 7
    %v130 = vsub.s32 0, %v129
    %v131 = vrot.slane %v126, %v130
    %v149 = vunpack.c.l.b16 %v110
    %v150 = vunpack.c.l.b16 %v111
    %v151 = vunpack.c.l.b16 %v112
    %v152 = vunpack.c.l.b16 %v113
    %v153 = vunpack.c.l.b16 %v114
    %v154 = vunpack.c.l.b16 %v115
    %v155 = vunpack.c.l.b16 %v116
    %v156 = vunpack.c.l.b16 %v117
    %v157 = vunpack.c.l.b16 %v118
    %v158 = vunpack.c.l.b16 %v119
    %v159 = vunpack.c.l.b16 %v120
    %v160 = vunpack.c.l.b16 %v121
    %v161 = vunpack.c.l.b16 %v122
    %v162 = vunpack.c.l.b16 %v123
    %v163 = vunpack.c.l.b16 %v124
    %v164 = vunpack.c.l.b16 %v125
    %v165 = vpack.c.b16 %v150, %v149
    %v166 = vpack.c.b16 %v152, %v151
    %v167 = vpack.c.b16 %v154, %v153
    %v168 = vpack.c.b16 %v156, %v155
    %v169 = vpack.c.b16 %v158, %v157
    %v170 = vpack.c.b16 %v160, %v159
    %v171 = vpack.c.b16 %v162, %v161
    %v172 = vpack.c.b16 %v164, %v163
    %181 = vmatprep.subr.bf16.mxu0 0
    %182 = vmatpush1.bf16.msra.mxu0 %v172
    %183 = vmatprep.subr.bf16.mxu0 0
    %184 = vmatpush1.bf16.msra.mxu0 %v171
    %185 = vmatprep.subr.bf16.mxu0 0
    %186 = vmatpush1.bf16.msra.mxu0 %v170
    %187 = vmatprep.subr.bf16.mxu0 0
    %188 = vmatpush1.bf16.msra.mxu0 %v169
    %189 = vmatprep.subr.bf16.mxu0 0
    %190 = vmatpush1.bf16.msra.mxu0 %v168
    %191 = vmatprep.subr.bf16.mxu0 0
    %192 = vmatpush1.bf16.msra.mxu0 %v167
    %193 = vmatprep.subr.bf16.mxu0 0
    %194 = vmatpush1.bf16.msra.mxu0 %v166
    %195 = vmatprep.subr.bf16.mxu0 0
    %196 = vmatpush1.bf16.msra.mxu0 %v165
    %197 = vmatprep.subr.bf16.mxu0 0
    %198 = vmatpush2.bf16.msra.mxu0 0
    %199 = vmatprep.subr.bf16.mxu0 0
    %200 = vmatpush2.bf16.msra.mxu0 0
    %201 = vmatprep.subr.bf16.mxu0 0
    %202 = vmatpush2.bf16.msra.mxu0 0
    %203 = vmatprep.subr.bf16.mxu0 0
    %204 = vmatpush2.bf16.msra.mxu0 0
    %205 = vmatprep.subr.bf16.mxu0 0
    %206 = vmatpush2.bf16.msra.mxu0 0
    %207 = vmatprep.subr.bf16.mxu0 0
    %208 = vmatpush2.bf16.msra.mxu0 0
    %209 = vmatprep.subr.bf16.mxu0 0
    %210 = vmatpush2.bf16.msra.mxu0 0
    %211 = vmatprep.subr.bf16.mxu0 0
    %212 = vmatpush2.bf16.msra.mxu0 0
    %213 = vmatprep.mubr.bf16.mxu0 0
    %214 = vmatmul.mubr.bf16.gmra.mxu0 %v94
    %v215 = vpop.f32.mrf.mxu0
    %v216 = vadd.f32 %v131, %v215
    %v217 = vpop.f32.mrf.mxu0
    %v218 = vpop.f32.mrf.mxu0
    %v219 = vadd.f32 %v131, %v218
    %v220 = vpop.f32.mrf.mxu0
    %221 = vmatprep.mubr.bf16.mxu0 0
    %222 = vmatmul.mubr.bf16.gmra.mxu0 %v95
    %v223 = vpop.f32.mrf.mxu0
    %v224 = vadd.f32 %v131, %v223
    %v225 = vpop.f32.mrf.mxu0
    %v226 = vpop.f32.mrf.mxu0
    %v227 = vadd.f32 %v131, %v226
    %v228 = vpop.f32.mrf.mxu0
    %229 = vmatprep.mubr.bf16.mxu0 0
    %230 = vmatmul.mubr.bf16.gmra.mxu0 %v96
    %v231 = vpop.f32.mrf.mxu0
    %v232 = vadd.f32 %v131, %v231
    %v233 = vpop.f32.mrf.mxu0
    %v234 = vpop.f32.mrf.mxu0
    %v235 = vadd.f32 %v131, %v234
    %v236 = vpop.f32.mrf.mxu0
    %237 = vmatprep.mubr.bf16.mxu0 0
    %238 = vmatmul.mubr.bf16.gmra.mxu0 %v97
    %v239 = vpop.f32.mrf.mxu0
    %v240 = vadd.f32 %v131, %v239
    %v241 = vpop.f32.mrf.mxu0
    %v242 = vpop.f32.mrf.mxu0
    %v243 = vadd.f32 %v131, %v242
    %v244 = vpop.f32.mrf.mxu0
    %245 = vmatprep.mubr.bf16.mxu0 0
    %246 = vmatmul.mubr.bf16.gmra.mxu0 %v98
    %v247 = vpop.f32.mrf.mxu0
    %v248 = vadd.f32 %v131, %v247
    %v249 = vpop.f32.mrf.mxu0
    %v250 = vpop.f32.mrf.mxu0
    %v251 = vadd.f32 %v131, %v250
    %v252 = vpop.f32.mrf.mxu0
    %253 = vmatprep.mubr.bf16.mxu0 0
    %254 = vmatmul.mubr.bf16.gmra.mxu0 %v99
    %v255 = vpop.f32.mrf.mxu0
    %v256 = vadd.f32 %v131, %v255
    %v257 = vpop.f32.mrf.mxu0
    %v258 = vpop.f32.mrf.mxu0
    %v259 = vadd.f32 %v131, %v258
    %v260 = vpop.f32.mrf.mxu0
    %261 = vmatprep.mubr.bf16.mxu0 0
    %262 = vmatmul.mubr.bf16.gmra.mxu0 %v100
    %v263 = vpop.f32.mrf.mxu0
    %v264 = vadd.f32 %v131, %v263
    %v265 = vpop.f32.mrf.mxu0
    %v266 = vpop.f32.mrf.mxu0
    %v267 = vadd.f32 %v131, %v266
    %v268 = vpop.f32.mrf.mxu0
    %269 = vmatprep.mubr.bf16.mxu0 0
    %270 = vmatmul.mubr.bf16.gmra.mxu0 %v101
    %v271 = vpop.f32.mrf.mxu0
    %v272 = vadd.f32 %v131, %v271
    %v273 = vpop.f32.mrf.mxu0
    %v274 = vpop.f32.mrf.mxu0
    %v275 = vadd.f32 %v131, %v274
    %v276 = vpop.f32.mrf.mxu0
    %277 = vmatprep.mubr.bf16.mxu0 0
    %278 = vmatmul.mubr.bf16.gmra.mxu0 %v102
    %v279 = vpop.f32.mrf.mxu0
    %v280 = vadd.f32 %v131, %v279
    %v281 = vpop.f32.mrf.mxu0
    %v282 = vpop.f32.mrf.mxu0
    %v283 = vadd.f32 %v131, %v282
    %v284 = vpop.f32.mrf.mxu0
    %285 = vmatprep.mubr.bf16.mxu0 0
    %286 = vmatmul.mubr.bf16.gmra.mxu0 %v103
    %v287 = vpop.f32.mrf.mxu0
    %v288 = vadd.f32 %v131, %v287
    %v289 = vpop.f32.mrf.mxu0
    %v290 = vpop.f32.mrf.mxu0
    %v291 = vadd.f32 %v131, %v290
    %v292 = vpop.f32.mrf.mxu0
    %293 = vmatprep.mubr.bf16.mxu0 0
    %294 = vmatmul.mubr.bf16.gmra.mxu0 %v104
    %v295 = vpop.f32.mrf.mxu0
    %v296 = vadd.f32 %v131, %v295
    %v297 = vpop.f32.mrf.mxu0
    %v298 = vpop.f32.mrf.mxu0
    %v299 = vadd.f32 %v131, %v298
    %v300 = vpop.f32.mrf.mxu0
    %301 = vmatprep.mubr.bf16.mxu0 0
    %302 = vmatmul.mubr.bf16.gmra.mxu0 %v105
    %v303 = vpop.f32.mrf.mxu0
    %v304 = vadd.f32 %v131, %v303
    %v305 = vpop.f32.mrf.mxu0
    %v306 = vpop.f32.mrf.mxu0
    %v307 = vadd.f32 %v131, %v306
    %v308 = vpop.f32.mrf.mxu0
    %309 = vmatprep.mubr.bf16.mxu0 0
    %310 = vmatmul.mubr.bf16.gmra.mxu0 %v106
    %v311 = vpop.f32.mrf.mxu0
    %v312 = vadd.f32 %v131, %v311
    %v313 = vpop.f32.mrf.mxu0
    %v314 = vpop.f32.mrf.mxu0
    %v315 = vadd.f32 %v131, %v314
    %v316 = vpop.f32.mrf.mxu0
    %317 = vmatprep.mubr.bf16.mxu0 0
    %318 = vmatmul.mubr.bf16.gmra.mxu0 %v107
    %v319 = vpop.f32.mrf.mxu0
    %v320 = vadd.f32 %v131, %v319
    %v321 = vpop.f32.mrf.mxu0
    %v322 = vpop.f32.mrf.mxu0
    %v323 = vadd.f32 %v131, %v322
    %v324 = vpop.f32.mrf.mxu0
    %325 = vmatprep.mubr.bf16.mxu0 0
    %326 = vmatmul.mubr.bf16.gmra.mxu0 %v108
    %v327 = vpop.f32.mrf.mxu0
    %v328 = vadd.f32 %v131, %v327
    %v329 = vpop.f32.mrf.mxu0
    %v330 = vpop.f32.mrf.mxu0
    %v331 = vadd.f32 %v131, %v330
    %v332 = vpop.f32.mrf.mxu0
    %333 = vmatprep.mubr.bf16.mxu0 0
    %334 = vmatmul.mubr.bf16.gmra.mxu0 %v109
    %v335 = vpop.f32.mrf.mxu0
    %v336 = vadd.f32 %v131, %v335
    %v337 = vpop.f32.mrf.mxu0
    %v338 = vpop.f32.mrf.mxu0
    %v339 = vadd.f32 %v131, %v338
    %v340 = vpop.f32.mrf.mxu0
    %341 = vdwg.mxu0
    %v342 = vmul.f32 %v216, 0.2
    %v343 = vmul.f32 %v219, 0.2
    %v344 = vmul.f32 %v224, 0.2
    %v345 = vmul.f32 %v227, 0.2
    %v346 = vmul.f32 %v232, 0.2
    %v347 = vmul.f32 %v235, 0.2
    %v348 = vmul.f32 %v240, 0.2
    %v349 = vmul.f32 %v243, 0.2
    %v350 = vmul.f32 %v248, 0.2
    %v351 = vmul.f32 %v251, 0.2
    %v352 = vmul.f32 %v256, 0.2
    %v353 = vmul.f32 %v259, 0.2
    %v354 = vmul.f32 %v264, 0.2
    %v355 = vmul.f32 %v267, 0.2
    %v356 = vmul.f32 %v272, 0.2
    %v357 = vmul.f32 %v275, 0.2
    %v358 = vmul.f32 %v280, 0.2
    %v359 = vmul.f32 %v283, 0.2
    %v360 = vmul.f32 %v288, 0.2
    %v361 = vmul.f32 %v291, 0.2
    %v362 = vmul.f32 %v296, 0.2
    %v363 = vmul.f32 %v299, 0.2
    %v364 = vmul.f32 %v304, 0.2
    %v365 = vmul.f32 %v307, 0.2
    %v366 = vmul.f32 %v312, 0.2
    %v367 = vmul.f32 %v315, 0.2
    %v368 = vmul.f32 %v320, 0.2
    %v369 = vmul.f32 %v323, 0.2
    %v370 = vmul.f32 %v328, 0.2
    %v371 = vmul.f32 %v331, 0.2
    %v372 = vmul.f32 %v336, 0.2
    %v373 = vmul.f32 %v339, 0.2
    %v374 = vmax.f32 %v216, %v342
    %v375 = vmax.f32 %v219, %v343
    %v376 = vmax.f32 %v224, %v344
    %v377 = vmax.f32 %v227, %v345
    %v378 = vmax.f32 %v232, %v346
    %v379 = vmax.f32 %v235, %v347
    %v380 = vmax.f32 %v240, %v348
    %v381 = vmax.f32 %v243, %v349
    %v382 = vmax.f32 %v248, %v350
    %v383 = vmax.f32 %v251, %v351
    %v384 = vmax.f32 %v256, %v352
    %v385 = vmax.f32 %v259, %v353
    %v386 = vmax.f32 %v264, %v354
    %v387 = vmax.f32 %v267, %v355
    %v388 = vmax.f32 %v272, %v356
    %v389 = vmax.f32 %v275, %v357
    %v390 = vmax.f32 %v280, %v358
    %v391 = vmax.f32 %v283, %v359
    %v392 = vmax.f32 %v288, %v360
    %v393 = vmax.f32 %v291, %v361
    %v394 = vmax.f32 %v296, %v362
    %v395 = vmax.f32 %v299, %v363
    %v396 = vmax.f32 %v304, %v364
    %v397 = vmax.f32 %v307, %v365
    %v398 = vmax.f32 %v312, %v366
    %v399 = vmax.f32 %v315, %v367
    %v400 = vmax.f32 %v320, %v368
    %v401 = vmax.f32 %v323, %v369
    %v402 = vmax.f32 %v328, %v370
    %v403 = vmax.f32 %v331, %v371
    %v404 = vmax.f32 %v336, %v372
    %v405 = vmax.f32 %v339, %v373
    %v406 = vpack.c.bf16 %v375, %v374
    %v407 = vpack.c.bf16 %v377, %v376
    %v408 = vpack.c.bf16 %v379, %v378
    %v409 = vpack.c.bf16 %v381, %v380
    %v410 = vpack.c.bf16 %v383, %v382
    %v411 = vpack.c.bf16 %v385, %v384
    %v412 = vpack.c.bf16 %v387, %v386
    %v413 = vpack.c.bf16 %v389, %v388
    %v414 = vpack.c.bf16 %v391, %v390
    %v415 = vpack.c.bf16 %v393, %v392
    %v416 = vpack.c.bf16 %v395, %v394
    %v417 = vpack.c.bf16 %v397, %v396
    %v418 = vpack.c.bf16 %v399, %v398
    %v419 = vpack.c.bf16 %v401, %v400
    %v420 = vpack.c.bf16 %v403, %v402
    %v421 = vpack.c.bf16 %v405, %v404
    %v422 = vld [vmem:[#allocation5] sm:$0xf]
    %v423 = vld [vmem:[#allocation5 + $0x4] sm:$0xf]
    %v424 = vld [vmem:[#allocation5 + $0x8] sm:$0xf]
    %v425 = vld [vmem:[#allocation5 + $0xc] sm:$0xf]
    %v426 = vld [vmem:[#allocation5 + $0x10] sm:$0xf]
    %v427 = vld [vmem:[#allocation5 + $0x14] sm:$0xf]
    %v428 = vld [vmem:[#allocation5 + $0x18] sm:$0xf]
    %v429 = vld [vmem:[#allocation5 + $0x1c] sm:$0xf]
    %v430 = vld [vmem:[#allocation5 + $0x20] sm:$0xf]
    %v431 = vld [vmem:[#allocation5 + $0x24] sm:$0xf]
    %v432 = vld [vmem:[#allocation5 + $0x28] sm:$0xf]
    %v433 = vld [vmem:[#allocation5 + $0x2c] sm:$0xf]
    %v434 = vld [vmem:[#allocation5 + $0x30] sm:$0xf]
    %v435 = vld [vmem:[#allocation5 + $0x34] sm:$0xf]
    %v436 = vld [vmem:[#allocation5 + $0x38] sm:$0xf]
    %v437 = vld [vmem:[#allocation5 + $0x3c] sm:$0xf]
    %v438 = vld [vmem:[%s5] sm:$0x1]
    %v440 = vlaneseq
    %v441 = vshrl.u32 %v440, 7
    %v442 = vsub.s32 0, %v441
    %v443 = vrot.slane %v438, %v442
    %v461 = vunpack.c.l.b16 %v422
    %v462 = vunpack.c.l.b16 %v423
    %v463 = vunpack.c.l.b16 %v424
    %v464 = vunpack.c.l.b16 %v425
    %v465 = vunpack.c.l.b16 %v426
    %v466 = vunpack.c.l.b16 %v427
    %v467 = vunpack.c.l.b16 %v428
    %v468 = vunpack.c.l.b16 %v429
    %v469 = vunpack.c.l.b16 %v430
    %v470 = vunpack.c.l.b16 %v431
    %v471 = vunpack.c.l.b16 %v432
    %v472 = vunpack.c.l.b16 %v433
    %v473 = vunpack.c.l.b16 %v434
    %v474 = vunpack.c.l.b16 %v435
    %v475 = vunpack.c.l.b16 %v436
    %v476 = vunpack.c.l.b16 %v437
    %v477 = vpack.c.b16 %v462, %v461
    %v478 = vpack.c.b16 %v464, %v463
    %v479 = vpack.c.b16 %v466, %v465
    %v480 = vpack.c.b16 %v468, %v467
    %v481 = vpack.c.b16 %v470, %v469
    %v482 = vpack.c.b16 %v472, %v471
    %v483 = vpack.c.b16 %v474, %v473
    %v484 = vpack.c.b16 %v476, %v475
    %493 = vmatprep.subr.bf16.mxu0 0
    %494 = vmatpush1.bf16.msra.mxu0 %v484
    %495 = vmatprep.subr.bf16.mxu0 0
    %496 = vmatpush1.bf16.msra.mxu0 %v483
    %497 = vmatprep.subr.bf16.mxu0 0
    %498 = vmatpush1.bf16.msra.mxu0 %v482
    %499 = vmatprep.subr.bf16.mxu0 0
    %500 = vmatpush1.bf16.msra.mxu0 %v481
    %501 = vmatprep.subr.bf16.mxu0 0
    %502 = vmatpush1.bf16.msra.mxu0 %v480
    %503 = vmatprep.subr.bf16.mxu0 0
    %504 = vmatpush1.bf16.msra.mxu0 %v479
    %505 = vmatprep.subr.bf16.mxu0 0
    %506 = vmatpush1.bf16.msra.mxu0 %v478
    %507 = vmatprep.subr.bf16.mxu0 0
    %508 = vmatpush1.bf16.msra.mxu0 %v477
    %509 = vmatprep.subr.bf16.mxu0 0
    %510 = vmatpush2.bf16.msra.mxu0 0
    %511 = vmatprep.subr.bf16.mxu0 0
    %512 = vmatpush2.bf16.msra.mxu0 0
    %513 = vmatprep.subr.bf16.mxu0 0
    %514 = vmatpush2.bf16.msra.mxu0 0
    %515 = vmatprep.subr.bf16.mxu0 0
    %516 = vmatpush2.bf16.msra.mxu0 0
    %517 = vmatprep.subr.bf16.mxu0 0
    %518 = vmatpush2.bf16.msra.mxu0 0
    %519 = vmatprep.subr.bf16.mxu0 0
    %520 = vmatpush2.bf16.msra.mxu0 0
    %521 = vmatprep.subr.bf16.mxu0 0
    %522 = vmatpush2.bf16.msra.mxu0 0
    %523 = vmatprep.subr.bf16.mxu0 0
    %524 = vmatpush2.bf16.msra.mxu0 0
    %525 = vmatprep.mubr.bf16.mxu0 0
    %526 = vmatmul.mubr.bf16.gmra.mxu0 %v406
    %v527 = vpop.f32.mrf.mxu0
    %v528 = vadd.f32 %v443, %v527
    %v529 = vpop.f32.mrf.mxu0
    %v530 = vpop.f32.mrf.mxu0
    %v531 = vadd.f32 %v443, %v530
    %v532 = vpop.f32.mrf.mxu0
    %533 = vmatprep.mubr.bf16.mxu0 0
    %534 = vmatmul.mubr.bf16.gmra.mxu0 %v407
    %v535 = vpop.f32.mrf.mxu0
    %v536 = vadd.f32 %v443, %v535
    %v537 = vpop.f32.mrf.mxu0
    %v538 = vpop.f32.mrf.mxu0
    %v539 = vadd.f32 %v443, %v538
    %v540 = vpop.f32.mrf.mxu0
    %541 = vmatprep.mubr.bf16.mxu0 0
    %542 = vmatmul.mubr.bf16.gmra.mxu0 %v408
    %v543 = vpop.f32.mrf.mxu0
    %v544 = vadd.f32 %v443, %v543
    %v545 = vpop.f32.mrf.mxu0
    %v546 = vpop.f32.mrf.mxu0
    %v547 = vadd.f32 %v443, %v546
    %v548 = vpop.f32.mrf.mxu0
    %549 = vmatprep.mubr.bf16.mxu0 0
    %550 = vmatmul.mubr.bf16.gmra.mxu0 %v409
    %v551 = vpop.f32.mrf.mxu0
    %v552 = vadd.f32 %v443, %v551
    %v553 = vpop.f32.mrf.mxu0
    %v554 = vpop.f32.mrf.mxu0
    %v555 = vadd.f32 %v443, %v554
    %v556 = vpop.f32.mrf.mxu0
    %557 = vmatprep.mubr.bf16.mxu0 0
    %558 = vmatmul.mubr.bf16.gmra.mxu0 %v410
    %v559 = vpop.f32.mrf.mxu0
    %v560 = vadd.f32 %v443, %v559
    %v561 = vpop.f32.mrf.mxu0
    %v562 = vpop.f32.mrf.mxu0
    %v563 = vadd.f32 %v443, %v562
    %v564 = vpop.f32.mrf.mxu0
    %565 = vmatprep.mubr.bf16.mxu0 0
    %566 = vmatmul.mubr.bf16.gmra.mxu0 %v411
    %v567 = vpop.f32.mrf.mxu0
    %v568 = vadd.f32 %v443, %v567
    %v569 = vpop.f32.mrf.mxu0
    %v570 = vpop.f32.mrf.mxu0
    %v571 = vadd.f32 %v443, %v570
    %v572 = vpop.f32.mrf.mxu0
    %573 = vmatprep.mubr.bf16.mxu0 0
    %574 = vmatmul.mubr.bf16.gmra.mxu0 %v412
    %v575 = vpop.f32.mrf.mxu0
    %v576 = vadd.f32 %v443, %v575
    %v577 = vpop.f32.mrf.mxu0
    %v578 = vpop.f32.mrf.mxu0
    %v579 = vadd.f32 %v443, %v578
    %v580 = vpop.f32.mrf.mxu0
    %581 = vmatprep.mubr.bf16.mxu0 0
    %582 = vmatmul.mubr.bf16.gmra.mxu0 %v413
    %v583 = vpop.f32.mrf.mxu0
    %v584 = vadd.f32 %v443, %v583
    %v585 = vpop.f32.mrf.mxu0
    %v586 = vpop.f32.mrf.mxu0
    %v587 = vadd.f32 %v443, %v586
    %v588 = vpop.f32.mrf.mxu0
    %589 = vmatprep.mubr.bf16.mxu0 0
    %590 = vmatmul.mubr.bf16.gmra.mxu0 %v414
    %v591 = vpop.f32.mrf.mxu0
    %v592 = vadd.f32 %v443, %v591
    %v593 = vpop.f32.mrf.mxu0
    %v594 = vpop.f32.mrf.mxu0
    %v595 = vadd.f32 %v443, %v594
    %v596 = vpop.f32.mrf.mxu0
    %597 = vmatprep.mubr.bf16.mxu0 0
    %598 = vmatmul.mubr.bf16.gmra.mxu0 %v415
    %v599 = vpop.f32.mrf.mxu0
    %v600 = vadd.f32 %v443, %v599
    %v601 = vpop.f32.mrf.mxu0
    %v602 = vpop.f32.mrf.mxu0
    %v603 = vadd.f32 %v443, %v602
    %v604 = vpop.f32.mrf.mxu0
    %605 = vmatprep.mubr.bf16.mxu0 0
    %606 = vmatmul.mubr.bf16.gmra.mxu0 %v416
    %v607 = vpop.f32.mrf.mxu0
    %v608 = vadd.f32 %v443, %v607
    %v609 = vpop.f32.mrf.mxu0
    %v610 = vpop.f32.mrf.mxu0
    %v611 = vadd.f32 %v443, %v610
    %v612 = vpop.f32.mrf.mxu0
    %613 = vmatprep.mubr.bf16.mxu0 0
    %614 = vmatmul.mubr.bf16.gmra.mxu0 %v417
    %v615 = vpop.f32.mrf.mxu0
    %v616 = vadd.f32 %v443, %v615
    %v617 = vpop.f32.mrf.mxu0
    %v618 = vpop.f32.mrf.mxu0
    %v619 = vadd.f32 %v443, %v618
    %v620 = vpop.f32.mrf.mxu0
    %621 = vmatprep.mubr.bf16.mxu0 0
    %622 = vmatmul.mubr.bf16.gmra.mxu0 %v418
    %v623 = vpop.f32.mrf.mxu0
    %v624 = vadd.f32 %v443, %v623
    %v625 = vpop.f32.mrf.mxu0
    %v626 = vpop.f32.mrf.mxu0
    %v627 = vadd.f32 %v443, %v626
    %v628 = vpop.f32.mrf.mxu0
    %629 = vmatprep.mubr.bf16.mxu0 0
    %630 = vmatmul.mubr.bf16.gmra.mxu0 %v419
    %v631 = vpop.f32.mrf.mxu0
    %v632 = vadd.f32 %v443, %v631
    %v633 = vpop.f32.mrf.mxu0
    %v634 = vpop.f32.mrf.mxu0
    %v635 = vadd.f32 %v443, %v634
    %v636 = vpop.f32.mrf.mxu0
    %637 = vmatprep.mubr.bf16.mxu0 0
    %638 = vmatmul.mubr.bf16.gmra.mxu0 %v420
    %v639 = vpop.f32.mrf.mxu0
    %v640 = vadd.f32 %v443, %v639
    %v641 = vpop.f32.mrf.mxu0
    %v642 = vpop.f32.mrf.mxu0
    %v643 = vadd.f32 %v443, %v642
    %v644 = vpop.f32.mrf.mxu0
    %645 = vmatprep.mubr.bf16.mxu0 0
    %646 = vmatmul.mubr.bf16.gmra.mxu0 %v421
    %v647 = vpop.f32.mrf.mxu0
    %v648 = vadd.f32 %v443, %v647
    %v649 = vpop.f32.mrf.mxu0
    %v650 = vpop.f32.mrf.mxu0
    %v651 = vadd.f32 %v443, %v650
    %v652 = vpop.f32.mrf.mxu0
    %653 = vdwg.mxu0
    %v654 = vmul.f32 %v528, 0.2
    %v655 = vmul.f32 %v531, 0.2
    %v656 = vmul.f32 %v536, 0.2
    %v657 = vmul.f32 %v539, 0.2
    %v658 = vmul.f32 %v544, 0.2
    %v659 = vmul.f32 %v547, 0.2
    %v660 = vmul.f32 %v552, 0.2
    %v661 = vmul.f32 %v555, 0.2
    %v662 = vmul.f32 %v560, 0.2
    %v663 = vmul.f32 %v563, 0.2
    %v664 = vmul.f32 %v568, 0.2
    %v665 = vmul.f32 %v571, 0.2
    %v666 = vmul.f32 %v576, 0.2
    %v667 = vmul.f32 %v579, 0.2
    %v668 = vmul.f32 %v584, 0.2
    %v669 = vmul.f32 %v587, 0.2
    %v670 = vmul.f32 %v592, 0.2
    %v671 = vmul.f32 %v595, 0.2
    %v672 = vmul.f32 %v600, 0.2
    %v673 = vmul.f32 %v603, 0.2
    %v674 = vmul.f32 %v608, 0.2
    %v675 = vmul.f32 %v611, 0.2
    %v676 = vmul.f32 %v616, 0.2
    %v677 = vmul.f32 %v619, 0.2
    %v678 = vmul.f32 %v624, 0.2
    %v679 = vmul.f32 %v627, 0.2
    %v680 = vmul.f32 %v632, 0.2
    %v681 = vmul.f32 %v635, 0.2
    %v682 = vmul.f32 %v640, 0.2
    %v683 = vmul.f32 %v643, 0.2
    %v684 = vmul.f32 %v648, 0.2
    %v685 = vmul.f32 %v651, 0.2
    %v686 = vmax.f32 %v528, %v654
    %v687 = vmax.f32 %v531, %v655
    %v688 = vmax.f32 %v536, %v656
    %v689 = vmax.f32 %v539, %v657
    %v690 = vmax.f32 %v544, %v658
    %v691 = vmax.f32 %v547, %v659
    %v692 = vmax.f32 %v552, %v660
    %v693 = vmax.f32 %v555, %v661
    %v694 = vmax.f32 %v560, %v662
    %v695 = vmax.f32 %v563, %v663
    %v696 = vmax.f32 %v568, %v664
    %v697 = vmax.f32 %v571, %v665
    %v698 = vmax.f32 %v576, %v666
    %v699 = vmax.f32 %v579, %v667
    %v700 = vmax.f32 %v584, %v668
    %v701 = vmax.f32 %v587, %v669
    %v702 = vmax.f32 %v592, %v670
    %v703 = vmax.f32 %v595, %v671
    %v704 = vmax.f32 %v600, %v672
    %v705 = vmax.f32 %v603, %v673
    %v706 = vmax.f32 %v608, %v674
    %v707 = vmax.f32 %v611, %v675
    %v708 = vmax.f32 %v616, %v676
    %v709 = vmax.f32 %v619, %v677
    %v710 = vmax.f32 %v624, %v678
    %v711 = vmax.f32 %v627, %v679
    %v712 = vmax.f32 %v632, %v680
    %v713 = vmax.f32 %v635, %v681
    %v714 = vmax.f32 %v640, %v682
    %v715 = vmax.f32 %v643, %v683
    %v716 = vmax.f32 %v648, %v684
    %v717 = vmax.f32 %v651, %v685
    %v718 = vld [vmem:[%s6] sm:$0x1]
    %v719 = vld [vmem:[%s1] sm:$0xff]
    %v720 = vld [vmem:[%s1 + $0x8] sm:$0xff]
    %v721 = vld [vmem:[%s1 + $0x10] sm:$0xff]
    %v722 = vld [vmem:[%s1 + $0x18] sm:$0xff]
    %v723 = vld [vmem:[%s1 + $0x20] sm:$0xff]
    %v724 = vld [vmem:[%s1 + $0x28] sm:$0xff]
    %v725 = vld [vmem:[%s1 + $0x30] sm:$0xff]
    %v726 = vld [vmem:[%s1 + $0x38] sm:$0xff]
    %v727 = vld [vmem:[%s1 + $0x40] sm:$0xff]
    %v728 = vld [vmem:[%s1 + $0x48] sm:$0xff]
    %v729 = vld [vmem:[%s1 + $0x50] sm:$0xff]
    %v730 = vld [vmem:[%s1 + $0x58] sm:$0xff]
    %v731 = vld [vmem:[%s1 + $0x60] sm:$0xff]
    %v732 = vld [vmem:[%s1 + $0x68] sm:$0xff]
    %v733 = vld [vmem:[%s1 + $0x70] sm:$0xff]
    %v734 = vld [vmem:[%s1 + $0x78] sm:$0xff]
    %v735 = vld [vmem:[%s1 + $0x80] sm:$0xff]
    %v736 = vld [vmem:[%s1 + $0x88] sm:$0xff]
    %v737 = vld [vmem:[%s1 + $0x90] sm:$0xff]
    %v738 = vld [vmem:[%s1 + $0x98] sm:$0xff]
    %v739 = vld [vmem:[%s1 + $0xa0] sm:$0xff]
    %v740 = vld [vmem:[%s1 + $0xa8] sm:$0xff]
    %v741 = vld [vmem:[%s1 + $0xb0] sm:$0xff]
    %v742 = vld [vmem:[%s1 + $0xb8] sm:$0xff]
    %v743 = vld [vmem:[%s1 + $0xc0] sm:$0xff]
    %v744 = vld [vmem:[%s1 + $0xc8] sm:$0xff]
    %v745 = vld [vmem:[%s1 + $0xd0] sm:$0xff]
    %v746 = vld [vmem:[%s1 + $0xd8] sm:$0xff]
    %v747 = vld [vmem:[%s1 + $0xe0] sm:$0xff]
    %v748 = vld [vmem:[%s1 + $0xe8] sm:$0xff]
    %v749 = vld [vmem:[%s1 + $0xf0] sm:$0xff]
    %v750 = vld [vmem:[%s1 + $0xf8] sm:$0xff]
    %v751 = vld [vmem:[%s7] sm:$0xf]
    %vm752 = vcmp.eq.s32.totalorder %v719, 0
    %vm753 = vcmp.eq.s32.totalorder %v720, 0
    %vm754 = vcmp.eq.s32.totalorder %v721, 0
    %vm755 = vcmp.eq.s32.totalorder %v722, 0
    %vm756 = vcmp.eq.s32.totalorder %v723, 0
    %vm757 = vcmp.eq.s32.totalorder %v724, 0
    %vm758 = vcmp.eq.s32.totalorder %v725, 0
    %vm759 = vcmp.eq.s32.totalorder %v726, 0
    %vm760 = vcmp.eq.s32.totalorder %v727, 0
    %vm761 = vcmp.eq.s32.totalorder %v728, 0
    %vm762 = vcmp.eq.s32.totalorder %v729, 0
    %vm763 = vcmp.eq.s32.totalorder %v730, 0
    %vm764 = vcmp.eq.s32.totalorder %v731, 0
    %vm765 = vcmp.eq.s32.totalorder %v732, 0
    %vm766 = vcmp.eq.s32.totalorder %v733, 0
    %vm767 = vcmp.eq.s32.totalorder %v734, 0
    %vm768 = vcmp.eq.s32.totalorder %v735, 0
    %vm769 = vcmp.eq.s32.totalorder %v736, 0
    %vm770 = vcmp.eq.s32.totalorder %v737, 0
    %vm771 = vcmp.eq.s32.totalorder %v738, 0
    %vm772 = vcmp.eq.s32.totalorder %v739, 0
    %vm773 = vcmp.eq.s32.totalorder %v740, 0
    %vm774 = vcmp.eq.s32.totalorder %v741, 0
    %vm775 = vcmp.eq.s32.totalorder %v742, 0
    %vm776 = vcmp.eq.s32.totalorder %v743, 0
    %vm777 = vcmp.eq.s32.totalorder %v744, 0
    %vm778 = vcmp.eq.s32.totalorder %v745, 0
    %vm779 = vcmp.eq.s32.totalorder %v746, 0
    %vm780 = vcmp.eq.s32.totalorder %v747, 0
    %vm781 = vcmp.eq.s32.totalorder %v748, 0
    %vm782 = vcmp.eq.s32.totalorder %v749, 0
    %vm783 = vcmp.eq.s32.totalorder %v750, 0
    %v784 = vsel %vm752, 1, 0
    %v785 = vsel %vm753, 1, 0
    %v786 = vsel %vm754, 1, 0
    %v787 = vsel %vm755, 1, 0
    %v788 = vsel %vm756, 1, 0
    %v789 = vsel %vm757, 1, 0
    %v790 = vsel %vm758, 1, 0
    %v791 = vsel %vm759, 1, 0
    %v792 = vsel %vm760, 1, 0
    %v793 = vsel %vm761, 1, 0
    %v794 = vsel %vm762, 1, 0
    %v795 = vsel %vm763, 1, 0
    %v796 = vsel %vm764, 1, 0
    %v797 = vsel %vm765, 1, 0
    %v798 = vsel %vm766, 1, 0
    %v799 = vsel %vm767, 1, 0
    %v800 = vsel %vm768, 1, 0
    %v801 = vsel %vm769, 1, 0
    %v802 = vsel %vm770, 1, 0
    %v803 = vsel %vm771, 1, 0
    %v804 = vsel %vm772, 1, 0
    %v805 = vsel %vm773, 1, 0
    %v806 = vsel %vm774, 1, 0
    %v807 = vsel %vm775, 1, 0
    %v808 = vsel %vm776, 1, 0
    %v809 = vsel %vm777, 1, 0
    %v810 = vsel %vm778, 1, 0
    %v811 = vsel %vm779, 1, 0
    %v812 = vsel %vm780, 1, 0
    %v813 = vsel %vm781, 1, 0
    %v814 = vsel %vm782, 1, 0
    %v815 = vsel %vm783, 1, 0
    %v816 = vcvt.s32.f32 %v784
    %v817 = vcvt.s32.f32 %v785
    %v818 = vcvt.s32.f32 %v786
    %v819 = vcvt.s32.f32 %v787
    %v820 = vcvt.s32.f32 %v788
    %v821 = vcvt.s32.f32 %v789
    %v822 = vcvt.s32.f32 %v790
    %v823 = vcvt.s32.f32 %v791
    %v824 = vcvt.s32.f32 %v792
    %v825 = vcvt.s32.f32 %v793
    %v826 = vcvt.s32.f32 %v794
    %v827 = vcvt.s32.f32 %v795
    %v828 = vcvt.s32.f32 %v796
    %v829 = vcvt.s32.f32 %v797
    %v830 = vcvt.s32.f32 %v798
    %v831 = vcvt.s32.f32 %v799
    %v832 = vcvt.s32.f32 %v800
    %v833 = vcvt.s32.f32 %v801
    %v834 = vcvt.s32.f32 %v802
    %v835 = vcvt.s32.f32 %v803
    %v836 = vcvt.s32.f32 %v804
    %v837 = vcvt.s32.f32 %v805
    %v838 = vcvt.s32.f32 %v806
    %v839 = vcvt.s32.f32 %v807
    %v840 = vcvt.s32.f32 %v808
    %v841 = vcvt.s32.f32 %v809
    %v842 = vcvt.s32.f32 %v810
    %v843 = vcvt.s32.f32 %v811
    %v844 = vcvt.s32.f32 %v812
    %v845 = vcvt.s32.f32 %v813
    %v846 = vcvt.s32.f32 %v814
    %v847 = vcvt.s32.f32 %v815
    %849 = vset.pattern.permute.xlu0 0
    %850 = vperm.xlu0 %849, %v816
    %v851 = vpop.permute.xlu0 %850
    %854 = vset.pattern.permute.xlu0 0
    %855 = vperm.xlu0 %854, %v817
    %v856 = vpop.permute.xlu0 %855
    %859 = vset.pattern.permute.xlu0 0
    %860 = vperm.xlu0 %859, %v818
    %v861 = vpop.permute.xlu0 %860
    %864 = vset.pattern.permute.xlu0 0
    %865 = vperm.xlu0 %864, %v819
    %v866 = vpop.permute.xlu0 %865
    %869 = vset.pattern.permute.xlu0 0
    %870 = vperm.xlu0 %869, %v820
    %v871 = vpop.permute.xlu0 %870
    %874 = vset.pattern.permute.xlu0 0
    %875 = vperm.xlu0 %874, %v821
    %v876 = vpop.permute.xlu0 %875
    %879 = vset.pattern.permute.xlu0 0
    %880 = vperm.xlu0 %879, %v822
    %v881 = vpop.permute.xlu0 %880
    %884 = vset.pattern.permute.xlu0 0
    %885 = vperm.xlu0 %884, %v823
    %v886 = vpop.permute.xlu0 %885
    %889 = vset.pattern.permute.xlu0 0
    %890 = vperm.xlu0 %889, %v824
    %v891 = vpop.permute.xlu0 %890
    %894 = vset.pattern.permute.xlu0 0
    %895 = vperm.xlu0 %894, %v825
    %v896 = vpop.permute.xlu0 %895
    %899 = vset.pattern.permute.xlu0 0
    %900 = vperm.xlu0 %899, %v826
    %v901 = vpop.permute.xlu0 %900
    %904 = vset.pattern.permute.xlu0 0
    %905 = vperm.xlu0 %904, %v827
    %v906 = vpop.permute.xlu0 %905
    %909 = vset.pattern.permute.xlu0 0
    %910 = vperm.xlu0 %909, %v828
    %v911 = vpop.permute.xlu0 %910
    %914 = vset.pattern.permute.xlu0 0
    %915 = vperm.xlu0 %914, %v829
    %v916 = vpop.permute.xlu0 %915
    %919 = vset.pattern.permute.xlu0 0
    %920 = vperm.xlu0 %919, %v830
    %v921 = vpop.permute.xlu0 %920
    %924 = vset.pattern.permute.xlu0 0
    %925 = vperm.xlu0 %924, %v831
    %v926 = vpop.permute.xlu0 %925
    %929 = vset.pattern.permute.xlu0 0
    %930 = vperm.xlu0 %929, %v832
    %v931 = vpop.permute.xlu0 %930
    %934 = vset.pattern.permute.xlu0 0
    %935 = vperm.xlu0 %934, %v833
    %v936 = vpop.permute.xlu0 %935
    %939 = vset.pattern.permute.xlu0 0
    %940 = vperm.xlu0 %939, %v834
    %v941 = vpop.permute.xlu0 %940
    %944 = vset.pattern.permute.xlu0 0
    %945 = vperm.xlu0 %944, %v835
    %v946 = vpop.permute.xlu0 %945
    %949 = vset.pattern.permute.xlu0 0
    %950 = vperm.xlu0 %949, %v836
    %v951 = vpop.permute.xlu0 %950
    %954 = vset.pattern.permute.xlu0 0
    %955 = vperm.xlu0 %954, %v837
    %v956 = vpop.permute.xlu0 %955
    %959 = vset.pattern.permute.xlu0 0
    %960 = vperm.xlu0 %959, %v838
    %v961 = vpop.permute.xlu0 %960
    %964 = vset.pattern.permute.xlu0 0
    %965 = vperm.xlu0 %964, %v839
    %v966 = vpop.permute.xlu0 %965
    %969 = vset.pattern.permute.xlu0 0
    %970 = vperm.xlu0 %969, %v840
    %v971 = vpop.permute.xlu0 %970
    %974 = vset.pattern.permute.xlu0 0
    %975 = vperm.xlu0 %974, %v841
    %v976 = vpop.permute.xlu0 %975
    %979 = vset.pattern.permute.xlu0 0
    %980 = vperm.xlu0 %979, %v842
    %v981 = vpop.permute.xlu0 %980
    %984 = vset.pattern.permute.xlu0 0
    %985 = vperm.xlu0 %984, %v843
    %v986 = vpop.permute.xlu0 %985
    %989 = vset.pattern.permute.xlu0 0
    %990 = vperm.xlu0 %989, %v844
    %v991 = vpop.permute.xlu0 %990
    %994 = vset.pattern.permute.xlu0 0
    %995 = vperm.xlu0 %994, %v845
    %v996 = vpop.permute.xlu0 %995
    %999 = vset.pattern.permute.xlu0 0
    %1000 = vperm.xlu0 %999, %v846
    %v1001 = vpop.permute.xlu0 %1000
    %1004 = vset.pattern.permute.xlu0 0
    %1005 = vperm.xlu0 %1004, %v847
    %v1006 = vpop.permute.xlu0 %1005
    %v1008 = vlaneseq
    %v1009 = vshrl.u32 %v1008, 7
    %v1010 = vsub.s32 0, %v1009
    %v1011 = vrot.slane %v751, %v1010
    %v1012 = vmul.f32 %v851, %v1011
    %v1013 = vmul.f32 %v856, %v1011
    %v1014 = vmul.f32 %v861, %v1011
    %v1015 = vmul.f32 %v866, %v1011
    %v1016 = vmul.f32 %v871, %v1011
    %v1017 = vmul.f32 %v876, %v1011
    %v1018 = vmul.f32 %v881, %v1011
    %v1019 = vmul.f32 %v886, %v1011
    %v1020 = vmul.f32 %v891, %v1011
    %v1021 = vmul.f32 %v896, %v1011
    %v1022 = vmul.f32 %v901, %v1011
    %v1023 = vmul.f32 %v906, %v1011
    %v1024 = vmul.f32 %v911, %v1011
    %v1025 = vmul.f32 %v916, %v1011
    %v1026 = vmul.f32 %v921, %v1011
    %v1027 = vmul.f32 %v926, %v1011
    %v1028 = vmul.f32 %v931, %v1011
    %v1029 = vmul.f32 %v936, %v1011
    %v1030 = vmul.f32 %v941, %v1011
    %v1031 = vmul.f32 %v946, %v1011
    %v1032 = vmul.f32 %v951, %v1011
    %v1033 = vmul.f32 %v956, %v1011
    %v1034 = vmul.f32 %v961, %v1011
    %v1035 = vmul.f32 %v966, %v1011
    %v1036 = vmul.f32 %v971, %v1011
    %v1037 = vmul.f32 %v976, %v1011
    %v1038 = vmul.f32 %v981, %v1011
    %v1039 = vmul.f32 %v986, %v1011
    %v1040 = vmul.f32 %v991, %v1011
    %v1041 = vmul.f32 %v996, %v1011
    %v1042 = vmul.f32 %v1001, %v1011
    %v1043 = vmul.f32 %v1006, %v1011
    %v1045 = vlaneseq
    %v1046 = vshrl.u32 %v1045, 7
    %v1047 = vsub.s32 0, %v1046
    %v1048 = vrot.slane %v718, %v1047
    %v1050 = vadd.f32 %v1048, %v1012
    %v1051 = vadd.f32 %v1048, %v1013
    %v1052 = vadd.f32 %v1048, %v1014
    %v1053 = vadd.f32 %v1048, %v1015
    %v1054 = vadd.f32 %v1048, %v1016
    %v1055 = vadd.f32 %v1048, %v1017
    %v1056 = vadd.f32 %v1048, %v1018
    %v1057 = vadd.f32 %v1048, %v1019
    %v1058 = vadd.f32 %v1048, %v1020
    %v1059 = vadd.f32 %v1048, %v1021
    %v1060 = vadd.f32 %v1048, %v1022
    %v1061 = vadd.f32 %v1048, %v1023
    %v1062 = vadd.f32 %v1048, %v1024
    %v1063 = vadd.f32 %v1048, %v1025
    %v1064 = vadd.f32 %v1048, %v1026
    %v1065 = vadd.f32 %v1048, %v1027
    %v1066 = vadd.f32 %v1048, %v1028
    %v1067 = vadd.f32 %v1048, %v1029
    %v1068 = vadd.f32 %v1048, %v1030
    %v1069 = vadd.f32 %v1048, %v1031
    %v1070 = vadd.f32 %v1048, %v1032
    %v1071 = vadd.f32 %v1048, %v1033
    %v1072 = vadd.f32 %v1048, %v1034
    %v1073 = vadd.f32 %v1048, %v1035
    %v1074 = vadd.f32 %v1048, %v1036
    %v1075 = vadd.f32 %v1048, %v1037
    %v1076 = vadd.f32 %v1048, %v1038
    %v1077 = vadd.f32 %v1048, %v1039
    %v1078 = vadd.f32 %v1048, %v1040
    %v1079 = vadd.f32 %v1048, %v1041
    %v1080 = vadd.f32 %v1048, %v1042
    %v1081 = vadd.f32 %v1048, %v1043
    %vm1082 = vcmp.eq.s32.totalorder %v719, 1
    %vm1083 = vcmp.eq.s32.totalorder %v720, 1
    %vm1084 = vcmp.eq.s32.totalorder %v721, 1
    %vm1085 = vcmp.eq.s32.totalorder %v722, 1
    %vm1086 = vcmp.eq.s32.totalorder %v723, 1
    %vm1087 = vcmp.eq.s32.totalorder %v724, 1
    %vm1088 = vcmp.eq.s32.totalorder %v725, 1
    %vm1089 = vcmp.eq.s32.totalorder %v726, 1
    %vm1090 = vcmp.eq.s32.totalorder %v727, 1
    %vm1091 = vcmp.eq.s32.totalorder %v728, 1
    %vm1092 = vcmp.eq.s32.totalorder %v729, 1
    %vm1093 = vcmp.eq.s32.totalorder %v730, 1
    %vm1094 = vcmp.eq.s32.totalorder %v731, 1
    %vm1095 = vcmp.eq.s32.totalorder %v732, 1
    %vm1096 = vcmp.eq.s32.totalorder %v733, 1
    %vm1097 = vcmp.eq.s32.totalorder %v734, 1
    %vm1098 = vcmp.eq.s32.totalorder %v735, 1
    %vm1099 = vcmp.eq.s32.totalorder %v736, 1
    %vm1100 = vcmp.eq.s32.totalorder %v737, 1
    %vm1101 = vcmp.eq.s32.totalorder %v738, 1
    %vm1102 = vcmp.eq.s32.totalorder %v739, 1
    %vm1103 = vcmp.eq.s32.totalorder %v740, 1
    %vm1104 = vcmp.eq.s32.totalorder %v741, 1
    %vm1105 = vcmp.eq.s32.totalorder %v742, 1
    %vm1106 = vcmp.eq.s32.totalorder %v743, 1
    %vm1107 = vcmp.eq.s32.totalorder %v744, 1
    %vm1108 = vcmp.eq.s32.totalorder %v745, 1
    %vm1109 = vcmp.eq.s32.totalorder %v746, 1
    %vm1110 = vcmp.eq.s32.totalorder %v747, 1
    %vm1111 = vcmp.eq.s32.totalorder %v748, 1
    %vm1112 = vcmp.eq.s32.totalorder %v749, 1
    %vm1113 = vcmp.eq.s32.totalorder %v750, 1
    %v1114 = vsel %vm1082, 1, 0
    %v1115 = vsel %vm1083, 1, 0
    %v1116 = vsel %vm1084, 1, 0
    %v1117 = vsel %vm1085, 1, 0
    %v1118 = vsel %vm1086, 1, 0
    %v1119 = vsel %vm1087, 1, 0
    %v1120 = vsel %vm1088, 1, 0
    %v1121 = vsel %vm1089, 1, 0
    %v1122 = vsel %vm1090, 1, 0
    %v1123 = vsel %vm1091, 1, 0
    %v1124 = vsel %vm1092, 1, 0
    %v1125 = vsel %vm1093, 1, 0
    %v1126 = vsel %vm1094, 1, 0
    %v1127 = vsel %vm1095, 1, 0
    %v1128 = vsel %vm1096, 1, 0
    %v1129 = vsel %vm1097, 1, 0
    %v1130 = vsel %vm1098, 1, 0
    %v1131 = vsel %vm1099, 1, 0
    %v1132 = vsel %vm1100, 1, 0
    %v1133 = vsel %vm1101, 1, 0
    %v1134 = vsel %vm1102, 1, 0
    %v1135 = vsel %vm1103, 1, 0
    %v1136 = vsel %vm1104, 1, 0
    %v1137 = vsel %vm1105, 1, 0
    %v1138 = vsel %vm1106, 1, 0
    %v1139 = vsel %vm1107, 1, 0
    %v1140 = vsel %vm1108, 1, 0
    %v1141 = vsel %vm1109, 1, 0
    %v1142 = vsel %vm1110, 1, 0
    %v1143 = vsel %vm1111, 1, 0
    %v1144 = vsel %vm1112, 1, 0
    %v1145 = vsel %vm1113, 1, 0
    %v1146 = vcvt.s32.f32 %v1114
    %v1147 = vcvt.s32.f32 %v1115
    %v1148 = vcvt.s32.f32 %v1116
    %v1149 = vcvt.s32.f32 %v1117
    %v1150 = vcvt.s32.f32 %v1118
    %v1151 = vcvt.s32.f32 %v1119
    %v1152 = vcvt.s32.f32 %v1120
    %v1153 = vcvt.s32.f32 %v1121
    %v1154 = vcvt.s32.f32 %v1122
    %v1155 = vcvt.s32.f32 %v1123
    %v1156 = vcvt.s32.f32 %v1124
    %v1157 = vcvt.s32.f32 %v1125
    %v1158 = vcvt.s32.f32 %v1126
    %v1159 = vcvt.s32.f32 %v1127
    %v1160 = vcvt.s32.f32 %v1128
    %v1161 = vcvt.s32.f32 %v1129
    %v1162 = vcvt.s32.f32 %v1130
    %v1163 = vcvt.s32.f32 %v1131
    %v1164 = vcvt.s32.f32 %v1132
    %v1165 = vcvt.s32.f32 %v1133
    %v1166 = vcvt.s32.f32 %v1134
    %v1167 = vcvt.s32.f32 %v1135
    %v1168 = vcvt.s32.f32 %v1136
    %v1169 = vcvt.s32.f32 %v1137
    %v1170 = vcvt.s32.f32 %v1138
    %v1171 = vcvt.s32.f32 %v1139
    %v1172 = vcvt.s32.f32 %v1140
    %v1173 = vcvt.s32.f32 %v1141
    %v1174 = vcvt.s32.f32 %v1142
    %v1175 = vcvt.s32.f32 %v1143
    %v1176 = vcvt.s32.f32 %v1144
    %v1177 = vcvt.s32.f32 %v1145
    %1179 = vset.pattern.permute.xlu0 0
    %1180 = vperm.xlu0 %1179, %v1146
    %v1181 = vpop.permute.xlu0 %1180
    %1184 = vset.pattern.permute.xlu0 0
    %1185 = vperm.xlu0 %1184, %v1147
    %v1186 = vpop.permute.xlu0 %1185
    %1189 = vset.pattern.permute.xlu0 0
    %1190 = vperm.xlu0 %1189, %v1148
    %v1191 = vpop.permute.xlu0 %1190
    %1194 = vset.pattern.permute.xlu0 0
    %1195 = vperm.xlu0 %1194, %v1149
    %v1196 = vpop.permute.xlu0 %1195
    %1199 = vset.pattern.permute.xlu0 0
    %1200 = vperm.xlu0 %1199, %v1150
    %v1201 = vpop.permute.xlu0 %1200
    %1204 = vset.pattern.permute.xlu0 0
    %1205 = vperm.xlu0 %1204, %v1151
    %v1206 = vpop.permute.xlu0 %1205
    %1209 = vset.pattern.permute.xlu0 0
    %1210 = vperm.xlu0 %1209, %v1152
    %v1211 = vpop.permute.xlu0 %1210
    %1214 = vset.pattern.permute.xlu0 0
    %1215 = vperm.xlu0 %1214, %v1153
    %v1216 = vpop.permute.xlu0 %1215
    %1219 = vset.pattern.permute.xlu0 0
    %1220 = vperm.xlu0 %1219, %v1154
    %v1221 = vpop.permute.xlu0 %1220
    %1224 = vset.pattern.permute.xlu0 0
    %1225 = vperm.xlu0 %1224, %v1155
    %v1226 = vpop.permute.xlu0 %1225
    %1229 = vset.pattern.permute.xlu0 0
    %1230 = vperm.xlu0 %1229, %v1156
    %v1231 = vpop.permute.xlu0 %1230
    %1234 = vset.pattern.permute.xlu0 0
    %1235 = vperm.xlu0 %1234, %v1157
    %v1236 = vpop.permute.xlu0 %1235
    %1239 = vset.pattern.permute.xlu0 0
    %1240 = vperm.xlu0 %1239, %v1158
    %v1241 = vpop.permute.xlu0 %1240
    %1244 = vset.pattern.permute.xlu0 0
    %1245 = vperm.xlu0 %1244, %v1159
    %v1246 = vpop.permute.xlu0 %1245
    %1249 = vset.pattern.permute.xlu0 0
    %1250 = vperm.xlu0 %1249, %v1160
    %v1251 = vpop.permute.xlu0 %1250
    %1254 = vset.pattern.permute.xlu0 0
    %1255 = vperm.xlu0 %1254, %v1161
    %v1256 = vpop.permute.xlu0 %1255
    %1259 = vset.pattern.permute.xlu0 0
    %1260 = vperm.xlu0 %1259, %v1162
    %v1261 = vpop.permute.xlu0 %1260
    %1264 = vset.pattern.permute.xlu0 0
    %1265 = vperm.xlu0 %1264, %v1163
    %v1266 = vpop.permute.xlu0 %1265
    %1269 = vset.pattern.permute.xlu0 0
    %1270 = vperm.xlu0 %1269, %v1164
    %v1271 = vpop.permute.xlu0 %1270
    %1274 = vset.pattern.permute.xlu0 0
    %1275 = vperm.xlu0 %1274, %v1165
    %v1276 = vpop.permute.xlu0 %1275
    %1279 = vset.pattern.permute.xlu0 0
    %1280 = vperm.xlu0 %1279, %v1166
    %v1281 = vpop.permute.xlu0 %1280
    %1284 = vset.pattern.permute.xlu0 0
    %1285 = vperm.xlu0 %1284, %v1167
    %v1286 = vpop.permute.xlu0 %1285
    %1289 = vset.pattern.permute.xlu0 0
    %1290 = vperm.xlu0 %1289, %v1168
    %v1291 = vpop.permute.xlu0 %1290
    %1294 = vset.pattern.permute.xlu0 0
    %1295 = vperm.xlu0 %1294, %v1169
    %v1296 = vpop.permute.xlu0 %1295
    %1299 = vset.pattern.permute.xlu0 0
    %1300 = vperm.xlu0 %1299, %v1170
    %v1301 = vpop.permute.xlu0 %1300
    %1304 = vset.pattern.permute.xlu0 0
    %1305 = vperm.xlu0 %1304, %v1171
    %v1306 = vpop.permute.xlu0 %1305
    %1309 = vset.pattern.permute.xlu0 0
    %1310 = vperm.xlu0 %1309, %v1172
    %v1311 = vpop.permute.xlu0 %1310
    %1314 = vset.pattern.permute.xlu0 0
    %1315 = vperm.xlu0 %1314, %v1173
    %v1316 = vpop.permute.xlu0 %1315
    %1319 = vset.pattern.permute.xlu0 0
    %1320 = vperm.xlu0 %1319, %v1174
    %v1321 = vpop.permute.xlu0 %1320
    %1324 = vset.pattern.permute.xlu0 0
    %1325 = vperm.xlu0 %1324, %v1175
    %v1326 = vpop.permute.xlu0 %1325
    %1329 = vset.pattern.permute.xlu0 0
    %1330 = vperm.xlu0 %1329, %v1176
    %v1331 = vpop.permute.xlu0 %1330
    %1334 = vset.pattern.permute.xlu0 0
    %1335 = vperm.xlu0 %1334, %v1177
    %v1336 = vpop.permute.xlu0 %1335
    %v1338 = vlaneseq
    %v1339 = vshrl.u32 %v1338, 7
    %v1340 = vsub.s32 1, %v1339
    %v1341 = vrot.slane %v751, %v1340
    %v1342 = vmul.f32 %v1181, %v1341
    %v1343 = vmul.f32 %v1186, %v1341
    %v1344 = vmul.f32 %v1191, %v1341
    %v1345 = vmul.f32 %v1196, %v1341
    %v1346 = vmul.f32 %v1201, %v1341
    %v1347 = vmul.f32 %v1206, %v1341
    %v1348 = vmul.f32 %v1211, %v1341
    %v1349 = vmul.f32 %v1216, %v1341
    %v1350 = vmul.f32 %v1221, %v1341
    %v1351 = vmul.f32 %v1226, %v1341
    %v1352 = vmul.f32 %v1231, %v1341
    %v1353 = vmul.f32 %v1236, %v1341
    %v1354 = vmul.f32 %v1241, %v1341
    %v1355 = vmul.f32 %v1246, %v1341
    %v1356 = vmul.f32 %v1251, %v1341
    %v1357 = vmul.f32 %v1256, %v1341
    %v1358 = vmul.f32 %v1261, %v1341
    %v1359 = vmul.f32 %v1266, %v1341
    %v1360 = vmul.f32 %v1271, %v1341
    %v1361 = vmul.f32 %v1276, %v1341
    %v1362 = vmul.f32 %v1281, %v1341
    %v1363 = vmul.f32 %v1286, %v1341
    %v1364 = vmul.f32 %v1291, %v1341
    %v1365 = vmul.f32 %v1296, %v1341
    %v1366 = vmul.f32 %v1301, %v1341
    %v1367 = vmul.f32 %v1306, %v1341
    %v1368 = vmul.f32 %v1311, %v1341
    %v1369 = vmul.f32 %v1316, %v1341
    %v1370 = vmul.f32 %v1321, %v1341
    %v1371 = vmul.f32 %v1326, %v1341
    %v1372 = vmul.f32 %v1331, %v1341
    %v1373 = vmul.f32 %v1336, %v1341
    %v1374 = vadd.f32 %v1050, %v1342
    %v1375 = vadd.f32 %v1051, %v1343
    %v1376 = vadd.f32 %v1052, %v1344
    %v1377 = vadd.f32 %v1053, %v1345
    %v1378 = vadd.f32 %v1054, %v1346
    %v1379 = vadd.f32 %v1055, %v1347
    %v1380 = vadd.f32 %v1056, %v1348
    %v1381 = vadd.f32 %v1057, %v1349
    %v1382 = vadd.f32 %v1058, %v1350
    %v1383 = vadd.f32 %v1059, %v1351
    %v1384 = vadd.f32 %v1060, %v1352
    %v1385 = vadd.f32 %v1061, %v1353
    %v1386 = vadd.f32 %v1062, %v1354
    %v1387 = vadd.f32 %v1063, %v1355
    %v1388 = vadd.f32 %v1064, %v1356
    %v1389 = vadd.f32 %v1065, %v1357
    %v1390 = vadd.f32 %v1066, %v1358
    %v1391 = vadd.f32 %v1067, %v1359
    %v1392 = vadd.f32 %v1068, %v1360
    %v1393 = vadd.f32 %v1069, %v1361
    %v1394 = vadd.f32 %v1070, %v1362
    %v1395 = vadd.f32 %v1071, %v1363
    %v1396 = vadd.f32 %v1072, %v1364
    %v1397 = vadd.f32 %v1073, %v1365
    %v1398 = vadd.f32 %v1074, %v1366
    %v1399 = vadd.f32 %v1075, %v1367
    %v1400 = vadd.f32 %v1076, %v1368
    %v1401 = vadd.f32 %v1077, %v1369
    %v1402 = vadd.f32 %v1078, %v1370
    %v1403 = vadd.f32 %v1079, %v1371
    %v1404 = vadd.f32 %v1080, %v1372
    %v1405 = vadd.f32 %v1081, %v1373
    %vm1406 = vcmp.eq.s32.totalorder %v719, 2
    %vm1407 = vcmp.eq.s32.totalorder %v720, 2
    %vm1408 = vcmp.eq.s32.totalorder %v721, 2
    %vm1409 = vcmp.eq.s32.totalorder %v722, 2
    %vm1410 = vcmp.eq.s32.totalorder %v723, 2
    %vm1411 = vcmp.eq.s32.totalorder %v724, 2
    %vm1412 = vcmp.eq.s32.totalorder %v725, 2
    %vm1413 = vcmp.eq.s32.totalorder %v726, 2
    %vm1414 = vcmp.eq.s32.totalorder %v727, 2
    %vm1415 = vcmp.eq.s32.totalorder %v728, 2
    %vm1416 = vcmp.eq.s32.totalorder %v729, 2
    %vm1417 = vcmp.eq.s32.totalorder %v730, 2
    %vm1418 = vcmp.eq.s32.totalorder %v731, 2
    %vm1419 = vcmp.eq.s32.totalorder %v732, 2
    %vm1420 = vcmp.eq.s32.totalorder %v733, 2
    %vm1421 = vcmp.eq.s32.totalorder %v734, 2
    %vm1422 = vcmp.eq.s32.totalorder %v735, 2
    %vm1423 = vcmp.eq.s32.totalorder %v736, 2
    %vm1424 = vcmp.eq.s32.totalorder %v737, 2
    %vm1425 = vcmp.eq.s32.totalorder %v738, 2
    %vm1426 = vcmp.eq.s32.totalorder %v739, 2
    %vm1427 = vcmp.eq.s32.totalorder %v740, 2
    %vm1428 = vcmp.eq.s32.totalorder %v741, 2
    %vm1429 = vcmp.eq.s32.totalorder %v742, 2
    %vm1430 = vcmp.eq.s32.totalorder %v743, 2
    %vm1431 = vcmp.eq.s32.totalorder %v744, 2
    %vm1432 = vcmp.eq.s32.totalorder %v745, 2
    %vm1433 = vcmp.eq.s32.totalorder %v746, 2
    %vm1434 = vcmp.eq.s32.totalorder %v747, 2
    %vm1435 = vcmp.eq.s32.totalorder %v748, 2
    %vm1436 = vcmp.eq.s32.totalorder %v749, 2
    %vm1437 = vcmp.eq.s32.totalorder %v750, 2
    %v1438 = vsel %vm1406, 1, 0
    %v1439 = vsel %vm1407, 1, 0
    %v1440 = vsel %vm1408, 1, 0
    %v1441 = vsel %vm1409, 1, 0
    %v1442 = vsel %vm1410, 1, 0
    %v1443 = vsel %vm1411, 1, 0
    %v1444 = vsel %vm1412, 1, 0
    %v1445 = vsel %vm1413, 1, 0
    %v1446 = vsel %vm1414, 1, 0
    %v1447 = vsel %vm1415, 1, 0
    %v1448 = vsel %vm1416, 1, 0
    %v1449 = vsel %vm1417, 1, 0
    %v1450 = vsel %vm1418, 1, 0
    %v1451 = vsel %vm1419, 1, 0
    %v1452 = vsel %vm1420, 1, 0
    %v1453 = vsel %vm1421, 1, 0
    %v1454 = vsel %vm1422, 1, 0
    %v1455 = vsel %vm1423, 1, 0
    %v1456 = vsel %vm1424, 1, 0
    %v1457 = vsel %vm1425, 1, 0
    %v1458 = vsel %vm1426, 1, 0
    %v1459 = vsel %vm1427, 1, 0
    %v1460 = vsel %vm1428, 1, 0
    %v1461 = vsel %vm1429, 1, 0
    %v1462 = vsel %vm1430, 1, 0
    %v1463 = vsel %vm1431, 1, 0
    %v1464 = vsel %vm1432, 1, 0
    %v1465 = vsel %vm1433, 1, 0
    %v1466 = vsel %vm1434, 1, 0
    %v1467 = vsel %vm1435, 1, 0
    %v1468 = vsel %vm1436, 1, 0
    %v1469 = vsel %vm1437, 1, 0
    %v1470 = vcvt.s32.f32 %v1438
    %v1471 = vcvt.s32.f32 %v1439
    %v1472 = vcvt.s32.f32 %v1440
    %v1473 = vcvt.s32.f32 %v1441
    %v1474 = vcvt.s32.f32 %v1442
    %v1475 = vcvt.s32.f32 %v1443
    %v1476 = vcvt.s32.f32 %v1444
    %v1477 = vcvt.s32.f32 %v1445
    %v1478 = vcvt.s32.f32 %v1446
    %v1479 = vcvt.s32.f32 %v1447
    %v1480 = vcvt.s32.f32 %v1448
    %v1481 = vcvt.s32.f32 %v1449
    %v1482 = vcvt.s32.f32 %v1450
    %v1483 = vcvt.s32.f32 %v1451
    %v1484 = vcvt.s32.f32 %v1452
    %v1485 = vcvt.s32.f32 %v1453
    %v1486 = vcvt.s32.f32 %v1454
    %v1487 = vcvt.s32.f32 %v1455
    %v1488 = vcvt.s32.f32 %v1456
    %v1489 = vcvt.s32.f32 %v1457
    %v1490 = vcvt.s32.f32 %v1458
    %v1491 = vcvt.s32.f32 %v1459
    %v1492 = vcvt.s32.f32 %v1460
    %v1493 = vcvt.s32.f32 %v1461
    %v1494 = vcvt.s32.f32 %v1462
    %v1495 = vcvt.s32.f32 %v1463
    %v1496 = vcvt.s32.f32 %v1464
    %v1497 = vcvt.s32.f32 %v1465
    %v1498 = vcvt.s32.f32 %v1466
    %v1499 = vcvt.s32.f32 %v1467
    %v1500 = vcvt.s32.f32 %v1468
    %v1501 = vcvt.s32.f32 %v1469
    %1503 = vset.pattern.permute.xlu0 0
    %1504 = vperm.xlu0 %1503, %v1470
    %v1505 = vpop.permute.xlu0 %1504
    %1508 = vset.pattern.permute.xlu0 0
    %1509 = vperm.xlu0 %1508, %v1471
    %v1510 = vpop.permute.xlu0 %1509
    %1513 = vset.pattern.permute.xlu0 0
    %1514 = vperm.xlu0 %1513, %v1472
    %v1515 = vpop.permute.xlu0 %1514
    %1518 = vset.pattern.permute.xlu0 0
    %1519 = vperm.xlu0 %1518, %v1473
    %v1520 = vpop.permute.xlu0 %1519
    %1523 = vset.pattern.permute.xlu0 0
    %1524 = vperm.xlu0 %1523, %v1474
    %v1525 = vpop.permute.xlu0 %1524
    %1528 = vset.pattern.permute.xlu0 0
    %1529 = vperm.xlu0 %1528, %v1475
    %v1530 = vpop.permute.xlu0 %1529
    %1533 = vset.pattern.permute.xlu0 0
    %1534 = vperm.xlu0 %1533, %v1476
    %v1535 = vpop.permute.xlu0 %1534
    %1538 = vset.pattern.permute.xlu0 0
    %1539 = vperm.xlu0 %1538, %v1477
    %v1540 = vpop.permute.xlu0 %1539
    %1543 = vset.pattern.permute.xlu0 0
    %1544 = vperm.xlu0 %1543, %v1478
    %v1545 = vpop.permute.xlu0 %1544
    %1548 = vset.pattern.permute.xlu0 0
    %1549 = vperm.xlu0 %1548, %v1479
    %v1550 = vpop.permute.xlu0 %1549
    %1553 = vset.pattern.permute.xlu0 0
    %1554 = vperm.xlu0 %1553, %v1480
    %v1555 = vpop.permute.xlu0 %1554
    %1558 = vset.pattern.permute.xlu0 0
    %1559 = vperm.xlu0 %1558, %v1481
    %v1560 = vpop.permute.xlu0 %1559
    %1563 = vset.pattern.permute.xlu0 0
    %1564 = vperm.xlu0 %1563, %v1482
    %v1565 = vpop.permute.xlu0 %1564
    %1568 = vset.pattern.permute.xlu0 0
    %1569 = vperm.xlu0 %1568, %v1483
    %v1570 = vpop.permute.xlu0 %1569
    %1573 = vset.pattern.permute.xlu0 0
    %1574 = vperm.xlu0 %1573, %v1484
    %v1575 = vpop.permute.xlu0 %1574
    %1578 = vset.pattern.permute.xlu0 0
    %1579 = vperm.xlu0 %1578, %v1485
    %v1580 = vpop.permute.xlu0 %1579
    %1583 = vset.pattern.permute.xlu0 0
    %1584 = vperm.xlu0 %1583, %v1486
    %v1585 = vpop.permute.xlu0 %1584
    %1588 = vset.pattern.permute.xlu0 0
    %1589 = vperm.xlu0 %1588, %v1487
    %v1590 = vpop.permute.xlu0 %1589
    %1593 = vset.pattern.permute.xlu0 0
    %1594 = vperm.xlu0 %1593, %v1488
    %v1595 = vpop.permute.xlu0 %1594
    %1598 = vset.pattern.permute.xlu0 0
    %1599 = vperm.xlu0 %1598, %v1489
    %v1600 = vpop.permute.xlu0 %1599
    %1603 = vset.pattern.permute.xlu0 0
    %1604 = vperm.xlu0 %1603, %v1490
    %v1605 = vpop.permute.xlu0 %1604
    %1608 = vset.pattern.permute.xlu0 0
    %1609 = vperm.xlu0 %1608, %v1491
    %v1610 = vpop.permute.xlu0 %1609
    %1613 = vset.pattern.permute.xlu0 0
    %1614 = vperm.xlu0 %1613, %v1492
    %v1615 = vpop.permute.xlu0 %1614
    %1618 = vset.pattern.permute.xlu0 0
    %1619 = vperm.xlu0 %1618, %v1493
    %v1620 = vpop.permute.xlu0 %1619
    %1623 = vset.pattern.permute.xlu0 0
    %1624 = vperm.xlu0 %1623, %v1494
    %v1625 = vpop.permute.xlu0 %1624
    %1628 = vset.pattern.permute.xlu0 0
    %1629 = vperm.xlu0 %1628, %v1495
    %v1630 = vpop.permute.xlu0 %1629
    %1633 = vset.pattern.permute.xlu0 0
    %1634 = vperm.xlu0 %1633, %v1496
    %v1635 = vpop.permute.xlu0 %1634
    %1638 = vset.pattern.permute.xlu0 0
    %1639 = vperm.xlu0 %1638, %v1497
    %v1640 = vpop.permute.xlu0 %1639
    %1643 = vset.pattern.permute.xlu0 0
    %1644 = vperm.xlu0 %1643, %v1498
    %v1645 = vpop.permute.xlu0 %1644
    %1648 = vset.pattern.permute.xlu0 0
    %1649 = vperm.xlu0 %1648, %v1499
    %v1650 = vpop.permute.xlu0 %1649
    %1653 = vset.pattern.permute.xlu0 0
    %1654 = vperm.xlu0 %1653, %v1500
    %v1655 = vpop.permute.xlu0 %1654
    %1658 = vset.pattern.permute.xlu0 0
    %1659 = vperm.xlu0 %1658, %v1501
    %v1660 = vpop.permute.xlu0 %1659
    %v1662 = vlaneseq
    %v1663 = vshrl.u32 %v1662, 7
    %v1664 = vsub.s32 2, %v1663
    %v1665 = vrot.slane %v751, %v1664
    %v1666 = vmul.f32 %v1505, %v1665
    %v1667 = vmul.f32 %v1510, %v1665
    %v1668 = vmul.f32 %v1515, %v1665
    %v1669 = vmul.f32 %v1520, %v1665
    %v1670 = vmul.f32 %v1525, %v1665
    %v1671 = vmul.f32 %v1530, %v1665
    %v1672 = vmul.f32 %v1535, %v1665
    %v1673 = vmul.f32 %v1540, %v1665
    %v1674 = vmul.f32 %v1545, %v1665
    %v1675 = vmul.f32 %v1550, %v1665
    %v1676 = vmul.f32 %v1555, %v1665
    %v1677 = vmul.f32 %v1560, %v1665
    %v1678 = vmul.f32 %v1565, %v1665
    %v1679 = vmul.f32 %v1570, %v1665
    %v1680 = vmul.f32 %v1575, %v1665
    %v1681 = vmul.f32 %v1580, %v1665
    %v1682 = vmul.f32 %v1585, %v1665
    %v1683 = vmul.f32 %v1590, %v1665
    %v1684 = vmul.f32 %v1595, %v1665
    %v1685 = vmul.f32 %v1600, %v1665
    %v1686 = vmul.f32 %v1605, %v1665
    %v1687 = vmul.f32 %v1610, %v1665
    %v1688 = vmul.f32 %v1615, %v1665
    %v1689 = vmul.f32 %v1620, %v1665
    %v1690 = vmul.f32 %v1625, %v1665
    %v1691 = vmul.f32 %v1630, %v1665
    %v1692 = vmul.f32 %v1635, %v1665
    %v1693 = vmul.f32 %v1640, %v1665
    %v1694 = vmul.f32 %v1645, %v1665
    %v1695 = vmul.f32 %v1650, %v1665
    %v1696 = vmul.f32 %v1655, %v1665
    %v1697 = vmul.f32 %v1660, %v1665
    %v1698 = vadd.f32 %v1374, %v1666
    %v1699 = vadd.f32 %v1375, %v1667
    %v1700 = vadd.f32 %v1376, %v1668
    %v1701 = vadd.f32 %v1377, %v1669
    %v1702 = vadd.f32 %v1378, %v1670
    %v1703 = vadd.f32 %v1379, %v1671
    %v1704 = vadd.f32 %v1380, %v1672
    %v1705 = vadd.f32 %v1381, %v1673
    %v1706 = vadd.f32 %v1382, %v1674
    %v1707 = vadd.f32 %v1383, %v1675
    %v1708 = vadd.f32 %v1384, %v1676
    %v1709 = vadd.f32 %v1385, %v1677
    %v1710 = vadd.f32 %v1386, %v1678
    %v1711 = vadd.f32 %v1387, %v1679
    %v1712 = vadd.f32 %v1388, %v1680
    %v1713 = vadd.f32 %v1389, %v1681
    %v1714 = vadd.f32 %v1390, %v1682
    %v1715 = vadd.f32 %v1391, %v1683
    %v1716 = vadd.f32 %v1392, %v1684
    %v1717 = vadd.f32 %v1393, %v1685
    %v1718 = vadd.f32 %v1394, %v1686
    %v1719 = vadd.f32 %v1395, %v1687
    %v1720 = vadd.f32 %v1396, %v1688
    %v1721 = vadd.f32 %v1397, %v1689
    %v1722 = vadd.f32 %v1398, %v1690
    %v1723 = vadd.f32 %v1399, %v1691
    %v1724 = vadd.f32 %v1400, %v1692
    %v1725 = vadd.f32 %v1401, %v1693
    %v1726 = vadd.f32 %v1402, %v1694
    %v1727 = vadd.f32 %v1403, %v1695
    %v1728 = vadd.f32 %v1404, %v1696
    %v1729 = vadd.f32 %v1405, %v1697
    %vm1730 = vcmp.eq.s32.totalorder %v719, 3
    %vm1731 = vcmp.eq.s32.totalorder %v720, 3
    %vm1732 = vcmp.eq.s32.totalorder %v721, 3
    %vm1733 = vcmp.eq.s32.totalorder %v722, 3
    %vm1734 = vcmp.eq.s32.totalorder %v723, 3
    %vm1735 = vcmp.eq.s32.totalorder %v724, 3
    %vm1736 = vcmp.eq.s32.totalorder %v725, 3
    %vm1737 = vcmp.eq.s32.totalorder %v726, 3
    %vm1738 = vcmp.eq.s32.totalorder %v727, 3
    %vm1739 = vcmp.eq.s32.totalorder %v728, 3
    %vm1740 = vcmp.eq.s32.totalorder %v729, 3
    %vm1741 = vcmp.eq.s32.totalorder %v730, 3
    %vm1742 = vcmp.eq.s32.totalorder %v731, 3
    %vm1743 = vcmp.eq.s32.totalorder %v732, 3
    %vm1744 = vcmp.eq.s32.totalorder %v733, 3
    %vm1745 = vcmp.eq.s32.totalorder %v734, 3
    %vm1746 = vcmp.eq.s32.totalorder %v735, 3
    %vm1747 = vcmp.eq.s32.totalorder %v736, 3
    %vm1748 = vcmp.eq.s32.totalorder %v737, 3
    %vm1749 = vcmp.eq.s32.totalorder %v738, 3
    %vm1750 = vcmp.eq.s32.totalorder %v739, 3
    %vm1751 = vcmp.eq.s32.totalorder %v740, 3
    %vm1752 = vcmp.eq.s32.totalorder %v741, 3
    %vm1753 = vcmp.eq.s32.totalorder %v742, 3
    %vm1754 = vcmp.eq.s32.totalorder %v743, 3
    %vm1755 = vcmp.eq.s32.totalorder %v744, 3
    %vm1756 = vcmp.eq.s32.totalorder %v745, 3
    %vm1757 = vcmp.eq.s32.totalorder %v746, 3
    %vm1758 = vcmp.eq.s32.totalorder %v747, 3
    %vm1759 = vcmp.eq.s32.totalorder %v748, 3
    %vm1760 = vcmp.eq.s32.totalorder %v749, 3
    %vm1761 = vcmp.eq.s32.totalorder %v750, 3
    %v1762 = vsel %vm1730, 1, 0
    %v1763 = vsel %vm1731, 1, 0
    %v1764 = vsel %vm1732, 1, 0
    %v1765 = vsel %vm1733, 1, 0
    %v1766 = vsel %vm1734, 1, 0
    %v1767 = vsel %vm1735, 1, 0
    %v1768 = vsel %vm1736, 1, 0
    %v1769 = vsel %vm1737, 1, 0
    %v1770 = vsel %vm1738, 1, 0
    %v1771 = vsel %vm1739, 1, 0
    %v1772 = vsel %vm1740, 1, 0
    %v1773 = vsel %vm1741, 1, 0
    %v1774 = vsel %vm1742, 1, 0
    %v1775 = vsel %vm1743, 1, 0
    %v1776 = vsel %vm1744, 1, 0
    %v1777 = vsel %vm1745, 1, 0
    %v1778 = vsel %vm1746, 1, 0
    %v1779 = vsel %vm1747, 1, 0
    %v1780 = vsel %vm1748, 1, 0
    %v1781 = vsel %vm1749, 1, 0
    %v1782 = vsel %vm1750, 1, 0
    %v1783 = vsel %vm1751, 1, 0
    %v1784 = vsel %vm1752, 1, 0
    %v1785 = vsel %vm1753, 1, 0
    %v1786 = vsel %vm1754, 1, 0
    %v1787 = vsel %vm1755, 1, 0
    %v1788 = vsel %vm1756, 1, 0
    %v1789 = vsel %vm1757, 1, 0
    %v1790 = vsel %vm1758, 1, 0
    %v1791 = vsel %vm1759, 1, 0
    %v1792 = vsel %vm1760, 1, 0
    %v1793 = vsel %vm1761, 1, 0
    %v1794 = vcvt.s32.f32 %v1762
    %v1795 = vcvt.s32.f32 %v1763
    %v1796 = vcvt.s32.f32 %v1764
    %v1797 = vcvt.s32.f32 %v1765
    %v1798 = vcvt.s32.f32 %v1766
    %v1799 = vcvt.s32.f32 %v1767
    %v1800 = vcvt.s32.f32 %v1768
    %v1801 = vcvt.s32.f32 %v1769
    %v1802 = vcvt.s32.f32 %v1770
    %v1803 = vcvt.s32.f32 %v1771
    %v1804 = vcvt.s32.f32 %v1772
    %v1805 = vcvt.s32.f32 %v1773
    %v1806 = vcvt.s32.f32 %v1774
    %v1807 = vcvt.s32.f32 %v1775
    %v1808 = vcvt.s32.f32 %v1776
    %v1809 = vcvt.s32.f32 %v1777
    %v1810 = vcvt.s32.f32 %v1778
    %v1811 = vcvt.s32.f32 %v1779
    %v1812 = vcvt.s32.f32 %v1780
    %v1813 = vcvt.s32.f32 %v1781
    %v1814 = vcvt.s32.f32 %v1782
    %v1815 = vcvt.s32.f32 %v1783
    %v1816 = vcvt.s32.f32 %v1784
    %v1817 = vcvt.s32.f32 %v1785
    %v1818 = vcvt.s32.f32 %v1786
    %v1819 = vcvt.s32.f32 %v1787
    %v1820 = vcvt.s32.f32 %v1788
    %v1821 = vcvt.s32.f32 %v1789
    %v1822 = vcvt.s32.f32 %v1790
    %v1823 = vcvt.s32.f32 %v1791
    %v1824 = vcvt.s32.f32 %v1792
    %v1825 = vcvt.s32.f32 %v1793
    %1827 = vset.pattern.permute.xlu0 0
    %1828 = vperm.xlu0 %1827, %v1794
    %v1829 = vpop.permute.xlu0 %1828
    %1832 = vset.pattern.permute.xlu0 0
    %1833 = vperm.xlu0 %1832, %v1795
    %v1834 = vpop.permute.xlu0 %1833
    %1837 = vset.pattern.permute.xlu0 0
    %1838 = vperm.xlu0 %1837, %v1796
    %v1839 = vpop.permute.xlu0 %1838
    %1842 = vset.pattern.permute.xlu0 0
    %1843 = vperm.xlu0 %1842, %v1797
    %v1844 = vpop.permute.xlu0 %1843
    %1847 = vset.pattern.permute.xlu0 0
    %1848 = vperm.xlu0 %1847, %v1798
    %v1849 = vpop.permute.xlu0 %1848
    %1852 = vset.pattern.permute.xlu0 0
    %1853 = vperm.xlu0 %1852, %v1799
    %v1854 = vpop.permute.xlu0 %1853
    %1857 = vset.pattern.permute.xlu0 0
    %1858 = vperm.xlu0 %1857, %v1800
    %v1859 = vpop.permute.xlu0 %1858
    %1862 = vset.pattern.permute.xlu0 0
    %1863 = vperm.xlu0 %1862, %v1801
    %v1864 = vpop.permute.xlu0 %1863
    %1867 = vset.pattern.permute.xlu0 0
    %1868 = vperm.xlu0 %1867, %v1802
    %v1869 = vpop.permute.xlu0 %1868
    %1872 = vset.pattern.permute.xlu0 0
    %1873 = vperm.xlu0 %1872, %v1803
    %v1874 = vpop.permute.xlu0 %1873
    %1877 = vset.pattern.permute.xlu0 0
    %1878 = vperm.xlu0 %1877, %v1804
    %v1879 = vpop.permute.xlu0 %1878
    %1882 = vset.pattern.permute.xlu0 0
    %1883 = vperm.xlu0 %1882, %v1805
    %v1884 = vpop.permute.xlu0 %1883
    %1887 = vset.pattern.permute.xlu0 0
    %1888 = vperm.xlu0 %1887, %v1806
    %v1889 = vpop.permute.xlu0 %1888
    %1892 = vset.pattern.permute.xlu0 0
    %1893 = vperm.xlu0 %1892, %v1807
    %v1894 = vpop.permute.xlu0 %1893
    %1897 = vset.pattern.permute.xlu0 0
    %1898 = vperm.xlu0 %1897, %v1808
    %v1899 = vpop.permute.xlu0 %1898
    %1902 = vset.pattern.permute.xlu0 0
    %1903 = vperm.xlu0 %1902, %v1809
    %v1904 = vpop.permute.xlu0 %1903
    %1907 = vset.pattern.permute.xlu0 0
    %1908 = vperm.xlu0 %1907, %v1810
    %v1909 = vpop.permute.xlu0 %1908
    %1912 = vset.pattern.permute.xlu0 0
    %1913 = vperm.xlu0 %1912, %v1811
    %v1914 = vpop.permute.xlu0 %1913
    %1917 = vset.pattern.permute.xlu0 0
    %1918 = vperm.xlu0 %1917, %v1812
    %v1919 = vpop.permute.xlu0 %1918
    %1922 = vset.pattern.permute.xlu0 0
    %1923 = vperm.xlu0 %1922, %v1813
    %v1924 = vpop.permute.xlu0 %1923
    %1927 = vset.pattern.permute.xlu0 0
    %1928 = vperm.xlu0 %1927, %v1814
    %v1929 = vpop.permute.xlu0 %1928
    %1932 = vset.pattern.permute.xlu0 0
    %1933 = vperm.xlu0 %1932, %v1815
    %v1934 = vpop.permute.xlu0 %1933
    %1937 = vset.pattern.permute.xlu0 0
    %1938 = vperm.xlu0 %1937, %v1816
    %v1939 = vpop.permute.xlu0 %1938
    %1942 = vset.pattern.permute.xlu0 0
    %1943 = vperm.xlu0 %1942, %v1817
    %v1944 = vpop.permute.xlu0 %1943
    %1947 = vset.pattern.permute.xlu0 0
    %1948 = vperm.xlu0 %1947, %v1818
    %v1949 = vpop.permute.xlu0 %1948
    %1952 = vset.pattern.permute.xlu0 0
    %1953 = vperm.xlu0 %1952, %v1819
    %v1954 = vpop.permute.xlu0 %1953
    %1957 = vset.pattern.permute.xlu0 0
    %1958 = vperm.xlu0 %1957, %v1820
    %v1959 = vpop.permute.xlu0 %1958
    %1962 = vset.pattern.permute.xlu0 0
    %1963 = vperm.xlu0 %1962, %v1821
    %v1964 = vpop.permute.xlu0 %1963
    %1967 = vset.pattern.permute.xlu0 0
    %1968 = vperm.xlu0 %1967, %v1822
    %v1969 = vpop.permute.xlu0 %1968
    %1972 = vset.pattern.permute.xlu0 0
    %1973 = vperm.xlu0 %1972, %v1823
    %v1974 = vpop.permute.xlu0 %1973
    %1977 = vset.pattern.permute.xlu0 0
    %1978 = vperm.xlu0 %1977, %v1824
    %v1979 = vpop.permute.xlu0 %1978
    %1982 = vset.pattern.permute.xlu0 0
    %1983 = vperm.xlu0 %1982, %v1825
    %v1984 = vpop.permute.xlu0 %1983
    %v1986 = vlaneseq
    %v1987 = vshrl.u32 %v1986, 7
    %v1988 = vsub.s32 3, %v1987
    %v1989 = vrot.slane %v751, %v1988
    %v1990 = vmul.f32 %v1829, %v1989
    %v1991 = vmul.f32 %v1834, %v1989
    %v1992 = vmul.f32 %v1839, %v1989
    %v1993 = vmul.f32 %v1844, %v1989
    %v1994 = vmul.f32 %v1849, %v1989
    %v1995 = vmul.f32 %v1854, %v1989
    %v1996 = vmul.f32 %v1859, %v1989
    %v1997 = vmul.f32 %v1864, %v1989
    %v1998 = vmul.f32 %v1869, %v1989
    %v1999 = vmul.f32 %v1874, %v1989
    %v2000 = vmul.f32 %v1879, %v1989
    %v2001 = vmul.f32 %v1884, %v1989
    %v2002 = vmul.f32 %v1889, %v1989
    %v2003 = vmul.f32 %v1894, %v1989
    %v2004 = vmul.f32 %v1899, %v1989
    %v2005 = vmul.f32 %v1904, %v1989
    %v2006 = vmul.f32 %v1909, %v1989
    %v2007 = vmul.f32 %v1914, %v1989
    %v2008 = vmul.f32 %v1919, %v1989
    %v2009 = vmul.f32 %v1924, %v1989
    %v2010 = vmul.f32 %v1929, %v1989
    %v2011 = vmul.f32 %v1934, %v1989
    %v2012 = vmul.f32 %v1939, %v1989
    %v2013 = vmul.f32 %v1944, %v1989
    %v2014 = vmul.f32 %v1949, %v1989
    %v2015 = vmul.f32 %v1954, %v1989
    %v2016 = vmul.f32 %v1959, %v1989
    %v2017 = vmul.f32 %v1964, %v1989
    %v2018 = vmul.f32 %v1969, %v1989
    %v2019 = vmul.f32 %v1974, %v1989
    %v2020 = vmul.f32 %v1979, %v1989
    %v2021 = vmul.f32 %v1984, %v1989
    %v2022 = vadd.f32 %v1698, %v1990
    %v2023 = vadd.f32 %v1699, %v1991
    %v2024 = vadd.f32 %v1700, %v1992
    %v2025 = vadd.f32 %v1701, %v1993
    %v2026 = vadd.f32 %v1702, %v1994
    %v2027 = vadd.f32 %v1703, %v1995
    %v2028 = vadd.f32 %v1704, %v1996
    %v2029 = vadd.f32 %v1705, %v1997
    %v2030 = vadd.f32 %v1706, %v1998
    %v2031 = vadd.f32 %v1707, %v1999
    %v2032 = vadd.f32 %v1708, %v2000
    %v2033 = vadd.f32 %v1709, %v2001
    %v2034 = vadd.f32 %v1710, %v2002
    %v2035 = vadd.f32 %v1711, %v2003
    %v2036 = vadd.f32 %v1712, %v2004
    %v2037 = vadd.f32 %v1713, %v2005
    %v2038 = vadd.f32 %v1714, %v2006
    %v2039 = vadd.f32 %v1715, %v2007
    %v2040 = vadd.f32 %v1716, %v2008
    %v2041 = vadd.f32 %v1717, %v2009
    %v2042 = vadd.f32 %v1718, %v2010
    %v2043 = vadd.f32 %v1719, %v2011
    %v2044 = vadd.f32 %v1720, %v2012
    %v2045 = vadd.f32 %v1721, %v2013
    %v2046 = vadd.f32 %v1722, %v2014
    %v2047 = vadd.f32 %v1723, %v2015
    %v2048 = vadd.f32 %v1724, %v2016
    %v2049 = vadd.f32 %v1725, %v2017
    %v2050 = vadd.f32 %v1726, %v2018
    %v2051 = vadd.f32 %v1727, %v2019
    %v2052 = vadd.f32 %v1728, %v2020
    %v2053 = vadd.f32 %v1729, %v2021
    %v2054 = vmul.f32 %v686, %v2022
    %v2055 = vmul.f32 %v687, %v2023
    %v2056 = vmul.f32 %v688, %v2024
    %v2057 = vmul.f32 %v689, %v2025
    %v2058 = vmul.f32 %v690, %v2026
    %v2059 = vmul.f32 %v691, %v2027
    %v2060 = vmul.f32 %v692, %v2028
    %v2061 = vmul.f32 %v693, %v2029
    %v2062 = vmul.f32 %v694, %v2030
    %v2063 = vmul.f32 %v695, %v2031
    %v2064 = vmul.f32 %v696, %v2032
    %v2065 = vmul.f32 %v697, %v2033
    %v2066 = vmul.f32 %v698, %v2034
    %v2067 = vmul.f32 %v699, %v2035
    %v2068 = vmul.f32 %v700, %v2036
    %v2069 = vmul.f32 %v701, %v2037
    %v2070 = vmul.f32 %v702, %v2038
    %v2071 = vmul.f32 %v703, %v2039
    %v2072 = vmul.f32 %v704, %v2040
    %v2073 = vmul.f32 %v705, %v2041
    %v2074 = vmul.f32 %v706, %v2042
    %v2075 = vmul.f32 %v707, %v2043
    %v2076 = vmul.f32 %v708, %v2044
    %v2077 = vmul.f32 %v709, %v2045
    %v2078 = vmul.f32 %v710, %v2046
    %v2079 = vmul.f32 %v711, %v2047
    %v2080 = vmul.f32 %v712, %v2048
    %v2081 = vmul.f32 %v713, %v2049
    %v2082 = vmul.f32 %v714, %v2050
    %v2083 = vmul.f32 %v715, %v2051
    %v2084 = vmul.f32 %v716, %v2052
    %v2085 = vmul.f32 %v717, %v2053
    %2086 = vadd.xlane.f32.xlu0 %v2054
    %v2087 = vpop.xlane.xlu0 %2086
    %2088 = vadd.xlane.f32.xlu0 %v2055
    %v2089 = vpop.xlane.xlu0 %2088
    %2090 = vadd.xlane.f32.xlu0 %v2056
    %v2091 = vpop.xlane.xlu0 %2090
    %2092 = vadd.xlane.f32.xlu0 %v2057
    %v2093 = vpop.xlane.xlu0 %2092
    %2094 = vadd.xlane.f32.xlu0 %v2058
    %v2095 = vpop.xlane.xlu0 %2094
    %2096 = vadd.xlane.f32.xlu0 %v2059
    %v2097 = vpop.xlane.xlu0 %2096
    %2098 = vadd.xlane.f32.xlu0 %v2060
    %v2099 = vpop.xlane.xlu0 %2098
    %2100 = vadd.xlane.f32.xlu0 %v2061
    %v2101 = vpop.xlane.xlu0 %2100
    %2102 = vadd.xlane.f32.xlu0 %v2062
    %v2103 = vpop.xlane.xlu0 %2102
    %2104 = vadd.xlane.f32.xlu0 %v2063
    %v2105 = vpop.xlane.xlu0 %2104
    %2106 = vadd.xlane.f32.xlu0 %v2064
    %v2107 = vpop.xlane.xlu0 %2106
    %2108 = vadd.xlane.f32.xlu0 %v2065
    %v2109 = vpop.xlane.xlu0 %2108
    %2110 = vadd.xlane.f32.xlu0 %v2066
    %v2111 = vpop.xlane.xlu0 %2110
    %2112 = vadd.xlane.f32.xlu0 %v2067
    %v2113 = vpop.xlane.xlu0 %2112
    %2114 = vadd.xlane.f32.xlu0 %v2068
    %v2115 = vpop.xlane.xlu0 %2114
    %2116 = vadd.xlane.f32.xlu0 %v2069
    %v2117 = vpop.xlane.xlu0 %2116
    %2118 = vadd.xlane.f32.xlu0 %v2070
    %v2119 = vpop.xlane.xlu0 %2118
    %2120 = vadd.xlane.f32.xlu0 %v2071
    %v2121 = vpop.xlane.xlu0 %2120
    %2122 = vadd.xlane.f32.xlu0 %v2072
    %v2123 = vpop.xlane.xlu0 %2122
    %2124 = vadd.xlane.f32.xlu0 %v2073
    %v2125 = vpop.xlane.xlu0 %2124
    %2126 = vadd.xlane.f32.xlu0 %v2074
    %v2127 = vpop.xlane.xlu0 %2126
    %2128 = vadd.xlane.f32.xlu0 %v2075
    %v2129 = vpop.xlane.xlu0 %2128
    %2130 = vadd.xlane.f32.xlu0 %v2076
    %v2131 = vpop.xlane.xlu0 %2130
    %2132 = vadd.xlane.f32.xlu0 %v2077
    %v2133 = vpop.xlane.xlu0 %2132
    %2134 = vadd.xlane.f32.xlu0 %v2078
    %v2135 = vpop.xlane.xlu0 %2134
    %2136 = vadd.xlane.f32.xlu0 %v2079
    %v2137 = vpop.xlane.xlu0 %2136
    %2138 = vadd.xlane.f32.xlu0 %v2080
    %v2139 = vpop.xlane.xlu0 %2138
    %2140 = vadd.xlane.f32.xlu0 %v2081
    %v2141 = vpop.xlane.xlu0 %2140
    %2142 = vadd.xlane.f32.xlu0 %v2082
    %v2143 = vpop.xlane.xlu0 %2142
    %2144 = vadd.xlane.f32.xlu0 %v2083
    %v2145 = vpop.xlane.xlu0 %2144
    %2146 = vadd.xlane.f32.xlu0 %v2084
    %v2147 = vpop.xlane.xlu0 %2146
    %2148 = vadd.xlane.f32.xlu0 %v2085
    %v2149 = vpop.xlane.xlu0 %2148
    %s2150 = sld [smem:[#allocation2]]
    %v2151 = vstv %s2150
    %v2152 = vadd.f32 %v2087, %v2151
    %v2153 = vadd.f32 %v2089, %v2151
    %v2154 = vadd.f32 %v2091, %v2151
    %v2155 = vadd.f32 %v2093, %v2151
    %v2156 = vadd.f32 %v2095, %v2151
    %v2157 = vadd.f32 %v2097, %v2151
    %v2158 = vadd.f32 %v2099, %v2151
    %v2159 = vadd.f32 %v2101, %v2151
    %v2160 = vadd.f32 %v2103, %v2151
    %v2161 = vadd.f32 %v2105, %v2151
    %v2162 = vadd.f32 %v2107, %v2151
    %v2163 = vadd.f32 %v2109, %v2151
    %v2164 = vadd.f32 %v2111, %v2151
    %v2165 = vadd.f32 %v2113, %v2151
    %v2166 = vadd.f32 %v2115, %v2151
    %v2167 = vadd.f32 %v2117, %v2151
    %v2168 = vadd.f32 %v2119, %v2151
    %v2169 = vadd.f32 %v2121, %v2151
    %v2170 = vadd.f32 %v2123, %v2151
    %v2171 = vadd.f32 %v2125, %v2151
    %v2172 = vadd.f32 %v2127, %v2151
    %v2173 = vadd.f32 %v2129, %v2151
    %v2174 = vadd.f32 %v2131, %v2151
    %v2175 = vadd.f32 %v2133, %v2151
    %v2176 = vadd.f32 %v2135, %v2151
    %v2177 = vadd.f32 %v2137, %v2151
    %v2178 = vadd.f32 %v2139, %v2151
    %v2179 = vadd.f32 %v2141, %v2151
    %v2180 = vadd.f32 %v2143, %v2151
    %v2181 = vadd.f32 %v2145, %v2151
    %v2182 = vadd.f32 %v2147, %v2151
    %v2183 = vadd.f32 %v2149, %v2151
    %vm2184 = vcmask 7168
    %2185 = vst.msk [vmem:[%s9] sm:$0xff] %vm2184, %v2152
    %2186 = vst.msk [vmem:[%s9 + $0x8] sm:$0xff] %vm2184, %v2153
    %2187 = vst.msk [vmem:[%s9 + $0x10] sm:$0xff] %vm2184, %v2154
    %2188 = vst.msk [vmem:[%s9 + $0x18] sm:$0xff] %vm2184, %v2155
    %2189 = vst.msk [vmem:[%s9 + $0x20] sm:$0xff] %vm2184, %v2156
    %2190 = vst.msk [vmem:[%s9 + $0x28] sm:$0xff] %vm2184, %v2157
    %2191 = vst.msk [vmem:[%s9 + $0x30] sm:$0xff] %vm2184, %v2158
    %2192 = vst.msk [vmem:[%s9 + $0x38] sm:$0xff] %vm2184, %v2159
    %2193 = vst.msk [vmem:[%s9 + $0x40] sm:$0xff] %vm2184, %v2160
    %2194 = vst.msk [vmem:[%s9 + $0x48] sm:$0xff] %vm2184, %v2161
    %2195 = vst.msk [vmem:[%s9 + $0x50] sm:$0xff] %vm2184, %v2162
    %2196 = vst.msk [vmem:[%s9 + $0x58] sm:$0xff] %vm2184, %v2163
    %2197 = vst.msk [vmem:[%s9 + $0x60] sm:$0xff] %vm2184, %v2164
    %2198 = vst.msk [vmem:[%s9 + $0x68] sm:$0xff] %vm2184, %v2165
    %2199 = vst.msk [vmem:[%s9 + $0x70] sm:$0xff] %vm2184, %v2166
    %2200 = vst.msk [vmem:[%s9 + $0x78] sm:$0xff] %vm2184, %v2167
    %2201 = vst.msk [vmem:[%s9 + $0x80] sm:$0xff] %vm2184, %v2168
    %2202 = vst.msk [vmem:[%s9 + $0x88] sm:$0xff] %vm2184, %v2169
    %2203 = vst.msk [vmem:[%s9 + $0x90] sm:$0xff] %vm2184, %v2170
    %2204 = vst.msk [vmem:[%s9 + $0x98] sm:$0xff] %vm2184, %v2171
    %2205 = vst.msk [vmem:[%s9 + $0xa0] sm:$0xff] %vm2184, %v2172
    %2206 = vst.msk [vmem:[%s9 + $0xa8] sm:$0xff] %vm2184, %v2173
    %2207 = vst.msk [vmem:[%s9 + $0xb0] sm:$0xff] %vm2184, %v2174
    %2208 = vst.msk [vmem:[%s9 + $0xb8] sm:$0xff] %vm2184, %v2175
    %2209 = vst.msk [vmem:[%s9 + $0xc0] sm:$0xff] %vm2184, %v2176
    %2210 = vst.msk [vmem:[%s9 + $0xc8] sm:$0xff] %vm2184, %v2177
    %2211 = vst.msk [vmem:[%s9 + $0xd0] sm:$0xff] %vm2184, %v2178
    %2212 = vst.msk [vmem:[%s9 + $0xd8] sm:$0xff] %vm2184, %v2179
    %2213 = vst.msk [vmem:[%s9 + $0xe0] sm:$0xff] %vm2184, %v2180
    %2214 = vst.msk [vmem:[%s9 + $0xe8] sm:$0xff] %vm2184, %v2181
    %2215 = vst.msk [vmem:[%s9 + $0xf0] sm:$0xff] %vm2184, %v2182
    %2216 = vst.msk [vmem:[%s9 + $0xf8] sm:$0xff] %vm2184, %v2183
    // Predicated region
    $region46: #{tpu_custom_call.1} parent=1 // pred_check
      _
    $region47: #{tpu_custom_call.1} parent=1 // pred_check_branch
      %2218 = sbr.rel (0) target = $region49
    $region48: #{tpu_custom_call.1} parent=1 // pred_region
      _
    $region49: #{tpu_custom_call.1} parent=1 // pred_fallthru
      _
    // Predicated region
    $region50: #{tpu_custom_call.1} parent=1 // pred_check
      _
    $region51: #{tpu_custom_call.1} parent=1 // pred_check_branch
      %2220 = sbr.rel (0) target = $region53
    $region52: #{tpu_custom_call.1} parent=1 // pred_region
      _
    $region53: #{tpu_custom_call.1} parent=1 // pred_fallthru
      _
    %2221 = vsyncpa [#allocation4], 1
    %2222 = vsyncpa [#allocation6], 1

</llo_original>
